<compile_context>
chip_gen: v7x
topology: tpu7x:2x2x1
jax: 0.10.0
libtpu: 0.0.40
codegen_flags: <defaults>
</compile_context>

<pallas_src>
import numpy as np
import jax
import jax.numpy as jnp
from jax.experimental import pallas as pl
from jax.experimental.pallas import tpu as pltpu


_NUM_ITERS = 3        # self.iter
_ATTN_EPS = 1e-8      # self.eps
_LN_EPS = 1e-5        # nn.LayerNorm default eps


# ----------------------------------------------------------------------------
# Fused Pallas kernel (closure over static sizes / packed-buffer row offsets)
# ----------------------------------------------------------------------------
def _make_kernel(num_slots, slot_dim):
    D, S = slot_dim, num_slots
    assert D % 64 == 0, "gate blocks need 128-lane alignment (2*D multiple of 128)"
    temp = float(D) ** -0.5
    # Static row offsets inside the packed weight buffer.
    KV_R, Q_R, GRU_R, M1_R, M2_R, S1_R, S2_R = 0, D, 2 * D, 4 * D, 5 * D, 7 * D, 8 * D

    def kernel(cc_ref, wts_ref, bias_ref, out_ref):
        def ln(x, g, b):
            mu = jnp.mean(x, axis=-1, keepdims=True)
            xc = x - mu
            var = jnp.mean(xc * xc, axis=-1, keepdims=True)
            return xc * jax.lax.rsqrt(var + _LN_EPS) * g + b

        def mm(x, w):
            # bf16 MXU operands, f32 accumulation.
            return jnp.dot(x.astype(jnp.bfloat16), w,
                           preferred_element_type=jnp.float32)

        cc = cc_ref[...]                                            # (N, D) f32

        # LayerNorm affines (f32, loop-invariant).
        ccn_g = bias_ref[8:9, 0:D]
        ccn_b = bias_ref[9:10, 0:D]
        mlp_g = bias_ref[10:11, 0:D]
        mlp_b = bias_ref[11:12, 0:D]

        # Fused k|v projection: one matmul, split + cast once before the loop.
        kv = mm(cc, wts_ref[KV_R:KV_R + D, 0:2 * D]) + bias_ref[0:1, 0:2 * D]
        k16 = kv[:, 0:D].astype(jnp.bfloat16)
        v16 = kv[:, D:2 * D].astype(jnp.bfloat16)

        for _ in range(_NUM_ITERS):                                 # fully unrolled
            cc_prev = cc
            ccn = ln(cc, ccn_g, ccn_b)
            q = mm(ccn, wts_ref[Q_R:Q_R + D, 0:D]) + bias_ref[1:2, 0:D]

            # attn[n, m] = <k_n, q_m> * temp  (contract last dims -> no explicit T)
            attn = jax.lax.dot_general(
                k16, q.astype(jnp.bfloat16), (((1,), (1,)), ((), ())),
                preferred_element_type=jnp.float32) * temp
            # softmax over dim 0 (the k / cluster axis)
            attn = attn - jnp.max(attn, axis=0, keepdims=True)
            attn = jnp.exp(attn)
            attn = attn / jnp.sum(attn, axis=0, keepdims=True)
            attn = attn + _ATTN_EPS
            attn = attn / jnp.sum(attn, axis=-1, keepdims=True)

            updates = mm(attn, v16)                                 # (N, D)

            # Fused GRUCell: ONE (N,2D)x(2D,8D) matmul; gate blocks are 128-lane
            # aligned: [0:D]=r, [2D:3D]=z, [4D:5D]=n_ih, [6D:7D]=n_hh.
            x = jnp.concatenate([updates, cc_prev], axis=-1)        # (N, 2D)
            g = mm(x, wts_ref[GRU_R:GRU_R + 2 * D, 0:8 * D]) + bias_ref[2:3, 0:8 * D]
            r = jax.nn.sigmoid(g[:, 0:D])
            z = jax.nn.sigmoid(g[:, 2 * D:3 * D])
            n = jnp.tanh(g[:, 4 * D:5 * D] + r * g[:, 6 * D:7 * D])
            cc = (1.0 - z) * n + z * cc_prev

            # cc = cc + MLP(cc):  LN -> Linear(D,2D) -> ReLU -> Linear(2D,D)
            h = ln(cc, mlp_g, mlp_b)
            h = jnp.maximum(
                mm(h, wts_ref[M1_R:M1_R + D, 0:2 * D]) + bias_ref[3:4, 0:2 * D], 0.0)
            cc = cc + mm(h, wts_ref[M2_R:M2_R + 2 * D, 0:D]) + bias_ref[4:5, 0:D]

        # Fused per-slot mapping MLPs: 2 wide matmuls (2nd one block-diagonal),
        # then one max over the cluster axis (MaxPool1d(kernel=num_cluster)).
        s = jnp.maximum(
            mm(cc, wts_ref[S1_R:S1_R + D, 0:S * D]) + bias_ref[5:6, 0:S * D], 0.0)
        s = mm(s, wts_ref[S2_R:S2_R + S * D, 0:S * D]) + bias_ref[6:7, 0:S * D]
        mx = jnp.max(s, axis=0, keepdims=True)                      # (1, S*D)
        for i in range(S):                                          # direct row stores
            out_ref[i:i + 1, :] = mx[:, i * D:(i + 1) * D]

    return kernel


# ----------------------------------------------------------------------------
# Wrapper
# ----------------------------------------------------------------------------
def slot_init_forward(cluster_centers, wts, bias, num_slots):
    """cluster_centers: (num_cluster, slot_dim) f32 -> (num_slots, slot_dim) f32."""
    _, D = cluster_centers.shape
    kernel = _make_kernel(num_slots, D)
    vmem = pl.BlockSpec(memory_space=pltpu.MemorySpace.VMEM)
    return pl.pallas_call(
        kernel,
        out_shape=jax.ShapeDtypeStruct((num_slots, D), jnp.float32),
        in_specs=[vmem, vmem, vmem],
        out_specs=vmem,
    )(cluster_centers, wts, bias)


# ----------------------------------------------------------------------------
# Raw (PyTorch-layout-equivalent) parameter construction
# ----------------------------------------------------------------------------
def init_params(key, num_slots, slot_dim):
    D = slot_dim
    keys = list(jax.random.split(key, 16 + 4 * num_slots))
    kit = iter(keys)

    def linear_init(k, fan_in, fan_out):
        kw, kb = jax.random.split(k)
        bound = 1.0 / np.sqrt(fan_in)
        w = jax.random.uniform(kw, (fan_in, fan_out), jnp.float32, -bound, bound)
        b = jax.random.uniform(kb, (1, fan_out), jnp.float32, -bound, bound)
        return w, b

    p = {}
    p["to_k_w"], p["to_k_b"] = linear_init(next(kit), D, D)
    p["to_q_w"], p["to_q_b"] = linear_init(next(kit), D, D)
    p["to_v_w"], p["to_v_b"] = linear_init(next(kit), D, D)

    # LayerNorm affines (perturbed so the correctness check exercises them).
    p["ccn_g"] = 1.0 + 0.1 * jax.random.normal(next(kit), (1, D), jnp.float32)
    p["ccn_b"] = 0.1 * jax.random.normal(next(kit), (1, D), jnp.float32)
    p["mlp_g"] = 1.0 + 0.1 * jax.random.normal(next(kit), (1, D), jnp.float32)
    p["mlp_b"] = 0.1 * jax.random.normal(next(kit), (1, D), jnp.float32)

    # GRUCell weights, pre-split per gate (r, z, n), transposed to (in, out).
    gb = 1.0 / np.sqrt(D)
    p["gru_wih"] = jax.random.uniform(next(kit), (3, D, D), jnp.float32, -gb, gb)
    p["gru_whh"] = jax.random.uniform(next(kit), (3, D, D), jnp.float32, -gb, gb)
    p["gru_bih"] = jax.random.uniform(next(kit), (3, 1, D), jnp.float32, -gb, gb)
    p["gru_bhh"] = jax.random.uniform(next(kit), (3, 1, D), jnp.float32, -gb, gb)

    # Residual MLP: LayerNorm -> Linear(D, 2D) -> ReLU -> Linear(2D, D)
    p["mlp_w1"], p["mlp_b1"] = linear_init(next(kit), D, 2 * D)
    p["mlp_w2"], p["mlp_b2"] = linear_init(next(kit), 2 * D, D)

    # Per-slot mapping MLPs, stacked along the slot axis.
    w1s, b1s, w2s, b2s = [], [], [], []
    for _ in range(num_slots):
        w1, b1 = linear_init(next(kit), D, D)
        w2, b2 = linear_init(next(kit), D, D)
        w1s.append(w1); b1s.append(b1); w2s.append(w2); b2s.append(b2)
    p["sm_w1"] = jnp.stack(w1s); p["sm_b1"] = jnp.stack(b1s)
    p["sm_w2"] = jnp.stack(w2s); p["sm_b2"] = jnp.stack(b2s)
    return p


# ----------------------------------------------------------------------------
# One-time packing into two kernel buffers (bf16 weights, f32 biases/affines)
# ----------------------------------------------------------------------------
def pack_params(params, num_slots, slot_dim):
    D, S = slot_dim, num_slots
    p = {k: np.asarray(v, np.float32) for k, v in params.items()}
    LW = max(8 * D, S * D)
    LW = ((LW + 127) // 128) * 128
    rows = 8 * D + S * D
    KV_R, Q_R, GRU_R, M1_R, M2_R, S1_R, S2_R = 0, D, 2 * D, 4 * D, 5 * D, 7 * D, 8 * D

    wts = np.zeros((rows, LW), np.float32)
    # k|v fused projection
    wts[KV_R:KV_R + D, 0:D] = p["to_k_w"]
    wts[KV_R:KV_R + D, D:2 * D] = p["to_v_w"]
    # q projection
    wts[Q_R:Q_R + D, 0:D] = p["to_q_w"]
    # GRU: rows [0:D]=updates path (W_ih), rows [D:2D]=hidden path (W_hh);
    # gate blocks at 2*D-lane offsets: r, z, n_ih, n_hh.
    for gi in range(3):
        wts[GRU_R:GRU_R + D, gi * 2 * D: gi * 2 * D + D] = p["gru_wih"][gi]
    for gi in range(2):
        wts[GRU_R + D:GRU_R + 2 * D, gi * 2 * D: gi * 2 * D + D] = p["gru_whh"][gi]
    wts[GRU_R + D:GRU_R + 2 * D, 6 * D:7 * D] = p["gru_whh"][2]
    # residual MLP
    wts[M1_R:M1_R + D, 0:2 * D] = p["mlp_w1"]
    wts[M2_R:M2_R + 2 * D, 0:D] = p["mlp_w2"]
    # slot-mapping layer 1 (heads along lanes) and layer 2 (block diagonal)
    for i in range(S):
        wts[S1_R:S1_R + D, i * D:(i + 1) * D] = p["sm_w1"][i]
        wts[S2_R + i * D:S2_R + (i + 1) * D, i * D:(i + 1) * D] = p["sm_w2"][i]

    bias = np.zeros((16, LW), np.float32)
    bias[0, 0:D] = p["to_k_b"][0]; bias[0, D:2 * D] = p["to_v_b"][0]
    bias[1, 0:D] = p["to_q_b"][0]
    # GRU biases: r/z merged (ih+hh); n biases stay split (bhh_n is gated by r).
    bias[2, 0:D] = p["gru_bih"][0, 0] + p["gru_bhh"][0, 0]
    bias[2, 2 * D:3 * D] = p["gru_bih"][1, 0] + p["gru_bhh"][1, 0]
    bias[2, 4 * D:5 * D] = p["gru_bih"][2, 0]
    bias[2, 6 * D:7 * D] = p["gru_bhh"][2, 0]
    bias[3, 0:2 * D] = p["mlp_b1"][0]
    bias[4, 0:D] = p["mlp_b2"][0]
    for i in range(S):
        bias[5, i * D:(i + 1) * D] = p["sm_b1"][i, 0]
        bias[6, i * D:(i + 1) * D] = p["sm_b2"][i, 0]
    bias[8, 0:D] = p["ccn_g"][0]
    bias[9, 0:D] = p["ccn_b"][0]
    bias[10, 0:D] = p["mlp_g"][0]
    bias[11, 0:D] = p["mlp_b"][0]

    return jnp.asarray(wts, jnp.bfloat16), jnp.asarray(bias, jnp.float32)


# ----------------------------------------------------------------------------
# Pure-JAX f32 reference (matches the PyTorch forward) for a numerical check
# ----------------------------------------------------------------------------
def slot_init_reference(cluster_centers, params):
    D = cluster_centers.shape[1]
    temp = float(D) ** -0.5

    def ln(x, g, b):
        mu = jnp.mean(x, -1, keepdims=True)
        xc = x - mu
        var = jnp.mean(xc * xc, -1, keepdims=True)
        return xc * jax.lax.rsqrt(var + _LN_EPS) * g + b

    cc = cluster_centers
    k = cc @ params["to_k_w"] + params["to_k_b"]
    v = cc @ params["to_v_w"] + params["to_v_b"]
    for _ in range(_NUM_ITERS):
        cc_prev = cc
        ccn = ln(cc, params["ccn_g"], params["ccn_b"])
        q = ccn @ params["to_q_w"] + params["to_q_b"]
        attn = jnp.einsum("nd,md->nm", k, q) * temp
        attn = jax.nn.softmax(attn, axis=0) + _ATTN_EPS
        attn = attn / jnp.sum(attn, axis=-1, keepdims=True)
        updates = attn @ v
        r = jax.nn.sigmoid(updates @ params["gru_wih"][0] + params["gru_bih"][0]
                           + cc_prev @ params["gru_whh"][0] + params["gru_bhh"][0])
        z = jax.nn.sigmoid(updates @ params["gru_wih"][1] + params["gru_bih"][1]
                           + cc_prev @ params["gru_whh"][1] + params["gru_bhh"][1])
        n = jnp.tanh(updates @ params["gru_wih"][2] + params["gru_bih"][2]
                     + r * (cc_prev @ params["gru_whh"][2] + params["gru_bhh"][2]))
        cc = (1.0 - z) * n + z * cc_prev
        h = ln(cc, params["mlp_g"], params["mlp_b"])
        h = jnp.maximum(h @ params["mlp_w1"] + params["mlp_b1"], 0.0)
        h = h @ params["mlp_w2"] + params["mlp_b2"]
        cc = cc + h

    num_slots = params["sm_w1"].shape[0]
    rows = []
    for i in range(num_slots):
        s = jnp.maximum(cc @ params["sm_w1"][i] + params["sm_b1"][i], 0.0)
        s = s @ params["sm_w2"][i] + params["sm_b2"][i]
        rows.append(jnp.max(s, axis=0))          # MaxPool1d(kernel=num_cluster)
    return jnp.stack(rows, axis=0)


if __name__ == "__main__":
    num_slots, num_cluster, slot_dim = 4, 10, 64

    key = jax.random.PRNGKey(0)
    k_cc, k_p = jax.random.split(key)
    cluster_centers = jax.random.normal(k_cc, (num_cluster, slot_dim), jnp.float32)
    params = init_params(k_p, num_slots, slot_dim)
    wts, bias = pack_params(params, num_slots, slot_dim)

    out = slot_init_forward(cluster_centers, wts, bias, num_slots)
    out = jax.block_until_ready(out)
    assert out.shape == (num_slots, slot_dim), out.shape

    ref = jax.block_until_ready(slot_init_reference(cluster_centers, params))
    # bf16 MXU operands (f32 accumulation) vs an f32 reference -> relaxed tolerance.
    np.testing.assert_allclose(np.asarray(out), np.asarray(ref), rtol=2e-2, atol=3e-2)

    print("KERNEL_OK")
</pallas_src>

<mosaic_0001>
module attributes {stable_mosaic.version = 11 : i64} {
  func.func @kernel(%arg0: memref<10x64xf32, #tpu.memory_space<vmem>>, %arg1: memref<768x512xbf16, #tpu.memory_space<vmem>>, %arg2: memref<16x512xf32, #tpu.memory_space<vmem>>, %arg3: memref<4x64xf32, #tpu.memory_space<vmem>>) attributes {dimension_semantics = [], scalar_prefetch = 0 : i64, scratch_operands = 0 : i64, tpu.core_type = #tpu.core_type<tc>} {
    %c0 = arith.constant 0 : index
    %c0_0 = arith.constant 0 : index
    %0 = vector.load %arg0[%c0, %c0_0] : memref<10x64xf32, #tpu.memory_space<vmem>>, vector<10x64xf32>
    %c8 = arith.constant 8 : index
    %c0_1 = arith.constant 0 : index
    %1 = vector.load %arg2[%c8, %c0_1] : memref<16x512xf32, #tpu.memory_space<vmem>>, vector<1x64xf32>
    %c9 = arith.constant 9 : index
    %c0_2 = arith.constant 0 : index
    %2 = vector.load %arg2[%c9, %c0_2] : memref<16x512xf32, #tpu.memory_space<vmem>>, vector<1x64xf32>
    %c10 = arith.constant 10 : index
    %c0_3 = arith.constant 0 : index
    %3 = vector.load %arg2[%c10, %c0_3] : memref<16x512xf32, #tpu.memory_space<vmem>>, vector<1x64xf32>
    %c11 = arith.constant 11 : index
    %c0_4 = arith.constant 0 : index
    %4 = vector.load %arg2[%c11, %c0_4] : memref<16x512xf32, #tpu.memory_space<vmem>>, vector<1x64xf32>
    %c0_5 = arith.constant 0 : index
    %c0_6 = arith.constant 0 : index
    %5 = vector.load %arg1[%c0_5, %c0_6] : memref<768x512xbf16, #tpu.memory_space<vmem>>, vector<64x128xbf16>
    %6 = arith.truncf %0 : vector<10x64xf32> to vector<10x64xbf16>
    %cst = arith.constant dense<0.000000e+00> : vector<10x128xf32>
    %7 = tpu.matmul %6, %5, %cst {dimension_numbers = #tpu.dot_dimension_numbers<[1], [0], [0], [1], [0, 0, 1, 1], [], []>} : vector<10x64xbf16>, vector<64x128xbf16>, vector<10x128xf32> -> vector<10x128xf32>
    %c0_7 = arith.constant 0 : index
    %c0_8 = arith.constant 0 : index
    %8 = vector.load %arg2[%c0_7, %c0_8] : memref<16x512xf32, #tpu.memory_space<vmem>>, vector<1x128xf32>
    %9 = vector.broadcast %8 : vector<1x128xf32> to vector<10x128xf32>
    %10 = arith.addf %7, %9 : vector<10x128xf32>
    %11 = vector.extract_strided_slice %10 {offsets = [0, 0], sizes = [10, 64], strides = [1, 1]} : vector<10x128xf32> to vector<10x64xf32>
    %12 = arith.truncf %11 : vector<10x64xf32> to vector<10x64xbf16>
    %13 = vector.extract_strided_slice %10 {offsets = [0, 64], sizes = [10, 64], strides = [1, 1]} : vector<10x128xf32> to vector<10x64xf32>
    %14 = arith.truncf %13 : vector<10x64xf32> to vector<10x64xbf16>
    %cst_9 = arith.constant dense<0.000000e+00> : vector<10xf32>
    %15 = vector.multi_reduction <add>, %0, %cst_9 [1] : vector<10x64xf32> to vector<10xf32>
    %16 = vector.shape_cast %15 : vector<10xf32> to vector<10x1xf32>
    %cst_10 = arith.constant 6.400000e+01 : f32
    %17 = vector.broadcast %cst_10 : f32 to vector<10x1xf32>
    %18 = arith.divf %16, %17 : vector<10x1xf32>
    %19 = vector.broadcast %18 : vector<10x1xf32> to vector<10x64xf32>
    %20 = arith.subf %0, %19 : vector<10x64xf32>
    %21 = arith.mulf %20, %20 : vector<10x64xf32>
    %cst_11 = arith.constant dense<0.000000e+00> : vector<10xf32>
    %22 = vector.multi_reduction <add>, %21, %cst_11 [1] : vector<10x64xf32> to vector<10xf32>
    %23 = vector.shape_cast %22 : vector<10xf32> to vector<10x1xf32>
    %cst_12 = arith.constant 6.400000e+01 : f32
    %24 = vector.broadcast %cst_12 : f32 to vector<10x1xf32>
    %25 = arith.divf %23, %24 : vector<10x1xf32>
    %cst_13 = arith.constant 9.99999974E-6 : f32
    %26 = vector.broadcast %cst_13 : f32 to vector<10x1xf32>
    %27 = arith.addf %25, %26 : vector<10x1xf32>
    %28 = math.rsqrt %27 : vector<10x1xf32>
    %29 = vector.broadcast %28 : vector<10x1xf32> to vector<10x64xf32>
    %30 = arith.mulf %20, %29 : vector<10x64xf32>
    %31 = vector.broadcast %1 : vector<1x64xf32> to vector<10x64xf32>
    %32 = arith.mulf %30, %31 : vector<10x64xf32>
    %33 = vector.broadcast %2 : vector<1x64xf32> to vector<10x64xf32>
    %34 = arith.addf %32, %33 : vector<10x64xf32>
    %c64 = arith.constant 64 : index
    %c0_14 = arith.constant 0 : index
    %35 = vector.load %arg1[%c64, %c0_14] : memref<768x512xbf16, #tpu.memory_space<vmem>>, vector<64x64xbf16>
    %36 = arith.truncf %34 : vector<10x64xf32> to vector<10x64xbf16>
    %cst_15 = arith.constant dense<0.000000e+00> : vector<10x64xf32>
    %37 = tpu.matmul %36, %35, %cst_15 {dimension_numbers = #tpu.dot_dimension_numbers<[1], [0], [0], [1], [0, 0, 1, 1], [], []>} : vector<10x64xbf16>, vector<64x64xbf16>, vector<10x64xf32> -> vector<10x64xf32>
    %c1 = arith.constant 1 : index
    %c0_16 = arith.constant 0 : index
    %38 = vector.load %arg2[%c1, %c0_16] : memref<16x512xf32, #tpu.memory_space<vmem>>, vector<1x64xf32>
    %39 = vector.broadcast %38 : vector<1x64xf32> to vector<10x64xf32>
    %40 = arith.addf %37, %39 : vector<10x64xf32>
    %41 = arith.truncf %40 : vector<10x64xf32> to vector<10x64xbf16>
    %cst_17 = arith.constant dense<0.000000e+00> : vector<10x10xf32>
    %42 = tpu.matmul %12, %41, %cst_17 {dimension_numbers = #tpu.dot_dimension_numbers<[1], [1], [0], [0], [0, 0, 1, 0], [], []>} : vector<10x64xbf16>, vector<10x64xbf16>, vector<10x10xf32> -> vector<10x10xf32>
    %cst_18 = arith.constant 1.250000e-01 : f32
    %43 = vector.broadcast %cst_18 : f32 to vector<10x10xf32>
    %44 = arith.mulf %42, %43 : vector<10x10xf32>
    %cst_19 = arith.constant dense<0xFF800000> : vector<10xf32>
    %45 = vector.multi_reduction <maximumf>, %44, %cst_19 [0] : vector<10x10xf32> to vector<10xf32>
    %46 = vector.shape_cast %45 : vector<10xf32> to vector<1x10xf32>
    %47 = vector.broadcast %46 : vector<1x10xf32> to vector<10x10xf32>
    %48 = arith.subf %44, %47 : vector<10x10xf32>
    %49 = math.exp %48 : vector<10x10xf32>
    %cst_20 = arith.constant dense<0.000000e+00> : vector<10xf32>
    %50 = vector.multi_reduction <add>, %49, %cst_20 [0] : vector<10x10xf32> to vector<10xf32>
    %51 = vector.shape_cast %50 : vector<10xf32> to vector<1x10xf32>
    %52 = vector.broadcast %51 : vector<1x10xf32> to vector<10x10xf32>
    %53 = arith.divf %49, %52 : vector<10x10xf32>
    %cst_21 = arith.constant 9.99999993E-9 : f32
    %54 = vector.broadcast %cst_21 : f32 to vector<10x10xf32>
    %55 = arith.addf %53, %54 : vector<10x10xf32>
    %cst_22 = arith.constant dense<0.000000e+00> : vector<10xf32>
    %56 = vector.multi_reduction <add>, %55, %cst_22 [1] : vector<10x10xf32> to vector<10xf32>
    %57 = vector.shape_cast %56 : vector<10xf32> to vector<10x1xf32>
    %58 = vector.broadcast %57 : vector<10x1xf32> to vector<10x10xf32>
    %59 = arith.divf %55, %58 : vector<10x10xf32>
    %60 = arith.truncf %59 : vector<10x10xf32> to vector<10x10xbf16>
    %cst_23 = arith.constant dense<0.000000e+00> : vector<10x64xf32>
    %61 = tpu.matmul %60, %14, %cst_23 {dimension_numbers = #tpu.dot_dimension_numbers<[1], [0], [0], [1], [0, 0, 1, 1], [], []>} : vector<10x10xbf16>, vector<10x64xbf16>, vector<10x64xf32> -> vector<10x64xf32>
    %62 = tpu.concatenate %61, %0 in 1 : vector<10x64xf32>, vector<10x64xf32> -> vector<10x128xf32>
    %c128 = arith.constant 128 : index
    %c0_24 = arith.constant 0 : index
    %63 = vector.load %arg1[%c128, %c0_24] : memref<768x512xbf16, #tpu.memory_space<vmem>>, vector<128x512xbf16>
    %64 = arith.truncf %62 : vector<10x128xf32> to vector<10x128xbf16>
    %cst_25 = arith.constant dense<0.000000e+00> : vector<10x512xf32>
    %65 = tpu.matmul %64, %63, %cst_25 {dimension_numbers = #tpu.dot_dimension_numbers<[1], [0], [0], [1], [0, 0, 1, 1], [], []>} : vector<10x128xbf16>, vector<128x512xbf16>, vector<10x512xf32> -> vector<10x512xf32>
    %c2 = arith.constant 2 : index
    %c0_26 = arith.constant 0 : index
    %66 = vector.load %arg2[%c2, %c0_26] : memref<16x512xf32, #tpu.memory_space<vmem>>, vector<1x512xf32>
    %67 = vector.broadcast %66 : vector<1x512xf32> to vector<10x512xf32>
    %68 = arith.addf %65, %67 : vector<10x512xf32>
    %69 = vector.extract_strided_slice %68 {offsets = [0, 0], sizes = [10, 64], strides = [1, 1]} : vector<10x512xf32> to vector<10x64xf32>
    %70 = arith.negf %69 : vector<10x64xf32>
    %71 = math.exp %70 : vector<10x64xf32>
    %cst_27 = arith.constant 1.000000e+00 : f32
    %72 = vector.broadcast %cst_27 : f32 to vector<10x64xf32>
    %73 = arith.addf %72, %71 : vector<10x64xf32>
    %74 = arith.divf %72, %73 : vector<10x64xf32>
    %75 = vector.extract_strided_slice %68 {offsets = [0, 128], sizes = [10, 64], strides = [1, 1]} : vector<10x512xf32> to vector<10x64xf32>
    %76 = arith.negf %75 : vector<10x64xf32>
    %77 = math.exp %76 : vector<10x64xf32>
    %cst_28 = arith.constant 1.000000e+00 : f32
    %78 = vector.broadcast %cst_28 : f32 to vector<10x64xf32>
    %79 = arith.addf %78, %77 : vector<10x64xf32>
    %80 = arith.divf %78, %79 : vector<10x64xf32>
    %81 = vector.extract_strided_slice %68 {offsets = [0, 256], sizes = [10, 64], strides = [1, 1]} : vector<10x512xf32> to vector<10x64xf32>
    %82 = vector.extract_strided_slice %68 {offsets = [0, 384], sizes = [10, 64], strides = [1, 1]} : vector<10x512xf32> to vector<10x64xf32>
    %83 = arith.mulf %74, %82 : vector<10x64xf32>
    %84 = arith.addf %81, %83 : vector<10x64xf32>
    %85 = math.tanh %84 : vector<10x64xf32>
    %cst_29 = arith.constant 1.000000e+00 : f32
    %86 = vector.broadcast %cst_29 : f32 to vector<10x64xf32>
    %87 = arith.subf %86, %80 : vector<10x64xf32>
    %88 = arith.mulf %87, %85 : vector<10x64xf32>
    %89 = arith.mulf %80, %0 : vector<10x64xf32>
    %90 = arith.addf %88, %89 : vector<10x64xf32>
    %cst_30 = arith.constant dense<0.000000e+00> : vector<10xf32>
    %91 = vector.multi_reduction <add>, %90, %cst_30 [1] : vector<10x64xf32> to vector<10xf32>
    %92 = vector.shape_cast %91 : vector<10xf32> to vector<10x1xf32>
    %cst_31 = arith.constant 6.400000e+01 : f32
    %93 = vector.broadcast %cst_31 : f32 to vector<10x1xf32>
    %94 = arith.divf %92, %93 : vector<10x1xf32>
    %95 = vector.broadcast %94 : vector<10x1xf32> to vector<10x64xf32>
    %96 = arith.subf %90, %95 : vector<10x64xf32>
    %97 = arith.mulf %96, %96 : vector<10x64xf32>
    %cst_32 = arith.constant dense<0.000000e+00> : vector<10xf32>
    %98 = vector.multi_reduction <add>, %97, %cst_32 [1] : vector<10x64xf32> to vector<10xf32>
    %99 = vector.shape_cast %98 : vector<10xf32> to vector<10x1xf32>
    %cst_33 = arith.constant 6.400000e+01 : f32
    %100 = vector.broadcast %cst_33 : f32 to vector<10x1xf32>
    %101 = arith.divf %99, %100 : vector<10x1xf32>
    %cst_34 = arith.constant 9.99999974E-6 : f32
    %102 = vector.broadcast %cst_34 : f32 to vector<10x1xf32>
    %103 = arith.addf %101, %102 : vector<10x1xf32>
    %104 = math.rsqrt %103 : vector<10x1xf32>
    %105 = vector.broadcast %104 : vector<10x1xf32> to vector<10x64xf32>
    %106 = arith.mulf %96, %105 : vector<10x64xf32>
    %107 = vector.broadcast %3 : vector<1x64xf32> to vector<10x64xf32>
    %108 = arith.mulf %106, %107 : vector<10x64xf32>
    %109 = vector.broadcast %4 : vector<1x64xf32> to vector<10x64xf32>
    %110 = arith.addf %108, %109 : vector<10x64xf32>
    %c256 = arith.constant 256 : index
    %c0_35 = arith.constant 0 : index
    %111 = vector.load %arg1[%c256, %c0_35] : memref<768x512xbf16, #tpu.memory_space<vmem>>, vector<64x128xbf16>
    %112 = arith.truncf %110 : vector<10x64xf32> to vector<10x64xbf16>
    %cst_36 = arith.constant dense<0.000000e+00> : vector<10x128xf32>
    %113 = tpu.matmul %112, %111, %cst_36 {dimension_numbers = #tpu.dot_dimension_numbers<[1], [0], [0], [1], [0, 0, 1, 1], [], []>} : vector<10x64xbf16>, vector<64x128xbf16>, vector<10x128xf32> -> vector<10x128xf32>
    %c3 = arith.constant 3 : index
    %c0_37 = arith.constant 0 : index
    %114 = vector.load %arg2[%c3, %c0_37] : memref<16x512xf32, #tpu.memory_space<vmem>>, vector<1x128xf32>
    %115 = vector.broadcast %114 : vector<1x128xf32> to vector<10x128xf32>
    %116 = arith.addf %113, %115 : vector<10x128xf32>
    %cst_38 = arith.constant 0.000000e+00 : f32
    %117 = vector.broadcast %cst_38 : f32 to vector<10x128xf32>
    %118 = arith.maximumf %116, %117 : vector<10x128xf32>
    %c320 = arith.constant 320 : index
    %c0_39 = arith.constant 0 : index
    %119 = vector.load %arg1[%c320, %c0_39] : memref<768x512xbf16, #tpu.memory_space<vmem>>, vector<128x64xbf16>
    %120 = arith.truncf %118 : vector<10x128xf32> to vector<10x128xbf16>
    %cst_40 = arith.constant dense<0.000000e+00> : vector<10x64xf32>
    %121 = tpu.matmul %120, %119, %cst_40 {dimension_numbers = #tpu.dot_dimension_numbers<[1], [0], [0], [1], [0, 0, 1, 1], [], []>} : vector<10x128xbf16>, vector<128x64xbf16>, vector<10x64xf32> -> vector<10x64xf32>
    %122 = arith.addf %90, %121 : vector<10x64xf32>
    %c4 = arith.constant 4 : index
    %c0_41 = arith.constant 0 : index
    %123 = vector.load %arg2[%c4, %c0_41] : memref<16x512xf32, #tpu.memory_space<vmem>>, vector<1x64xf32>
    %124 = vector.broadcast %123 : vector<1x64xf32> to vector<10x64xf32>
    %125 = arith.addf %122, %124 : vector<10x64xf32>
    %cst_42 = arith.constant dense<0.000000e+00> : vector<10xf32>
    %126 = vector.multi_reduction <add>, %125, %cst_42 [1] : vector<10x64xf32> to vector<10xf32>
    %127 = vector.shape_cast %126 : vector<10xf32> to vector<10x1xf32>
    %cst_43 = arith.constant 6.400000e+01 : f32
    %128 = vector.broadcast %cst_43 : f32 to vector<10x1xf32>
    %129 = arith.divf %127, %128 : vector<10x1xf32>
    %130 = vector.broadcast %129 : vector<10x1xf32> to vector<10x64xf32>
    %131 = arith.subf %125, %130 : vector<10x64xf32>
    %132 = arith.mulf %131, %131 : vector<10x64xf32>
    %cst_44 = arith.constant dense<0.000000e+00> : vector<10xf32>
    %133 = vector.multi_reduction <add>, %132, %cst_44 [1] : vector<10x64xf32> to vector<10xf32>
    %134 = vector.shape_cast %133 : vector<10xf32> to vector<10x1xf32>
    %cst_45 = arith.constant 6.400000e+01 : f32
    %135 = vector.broadcast %cst_45 : f32 to vector<10x1xf32>
    %136 = arith.divf %134, %135 : vector<10x1xf32>
    %cst_46 = arith.constant 9.99999974E-6 : f32
    %137 = vector.broadcast %cst_46 : f32 to vector<10x1xf32>
    %138 = arith.addf %136, %137 : vector<10x1xf32>
    %139 = math.rsqrt %138 : vector<10x1xf32>
    %140 = vector.broadcast %139 : vector<10x1xf32> to vector<10x64xf32>
    %141 = arith.mulf %131, %140 : vector<10x64xf32>
    %142 = vector.broadcast %1 : vector<1x64xf32> to vector<10x64xf32>
    %143 = arith.mulf %141, %142 : vector<10x64xf32>
    %144 = vector.broadcast %2 : vector<1x64xf32> to vector<10x64xf32>
    %145 = arith.addf %143, %144 : vector<10x64xf32>
    %c64_47 = arith.constant 64 : index
    %c0_48 = arith.constant 0 : index
    %146 = vector.load %arg1[%c64_47, %c0_48] : memref<768x512xbf16, #tpu.memory_space<vmem>>, vector<64x64xbf16>
    %147 = arith.truncf %145 : vector<10x64xf32> to vector<10x64xbf16>
    %cst_49 = arith.constant dense<0.000000e+00> : vector<10x64xf32>
    %148 = tpu.matmul %147, %146, %cst_49 {dimension_numbers = #tpu.dot_dimension_numbers<[1], [0], [0], [1], [0, 0, 1, 1], [], []>} : vector<10x64xbf16>, vector<64x64xbf16>, vector<10x64xf32> -> vector<10x64xf32>
    %c1_50 = arith.constant 1 : index
    %c0_51 = arith.constant 0 : index
    %149 = vector.load %arg2[%c1_50, %c0_51] : memref<16x512xf32, #tpu.memory_space<vmem>>, vector<1x64xf32>
    %150 = vector.broadcast %149 : vector<1x64xf32> to vector<10x64xf32>
    %151 = arith.addf %148, %150 : vector<10x64xf32>
    %152 = arith.truncf %151 : vector<10x64xf32> to vector<10x64xbf16>
    %cst_52 = arith.constant dense<0.000000e+00> : vector<10x10xf32>
    %153 = tpu.matmul %12, %152, %cst_52 {dimension_numbers = #tpu.dot_dimension_numbers<[1], [1], [0], [0], [0, 0, 1, 0], [], []>} : vector<10x64xbf16>, vector<10x64xbf16>, vector<10x10xf32> -> vector<10x10xf32>
    %cst_53 = arith.constant 1.250000e-01 : f32
    %154 = vector.broadcast %cst_53 : f32 to vector<10x10xf32>
    %155 = arith.mulf %153, %154 : vector<10x10xf32>
    %cst_54 = arith.constant dense<0xFF800000> : vector<10xf32>
    %156 = vector.multi_reduction <maximumf>, %155, %cst_54 [0] : vector<10x10xf32> to vector<10xf32>
    %157 = vector.shape_cast %156 : vector<10xf32> to vector<1x10xf32>
    %158 = vector.broadcast %157 : vector<1x10xf32> to vector<10x10xf32>
    %159 = arith.subf %155, %158 : vector<10x10xf32>
    %160 = math.exp %159 : vector<10x10xf32>
    %cst_55 = arith.constant dense<0.000000e+00> : vector<10xf32>
    %161 = vector.multi_reduction <add>, %160, %cst_55 [0] : vector<10x10xf32> to vector<10xf32>
    %162 = vector.shape_cast %161 : vector<10xf32> to vector<1x10xf32>
    %163 = vector.broadcast %162 : vector<1x10xf32> to vector<10x10xf32>
    %164 = arith.divf %160, %163 : vector<10x10xf32>
    %cst_56 = arith.constant 9.99999993E-9 : f32
    %165 = vector.broadcast %cst_56 : f32 to vector<10x10xf32>
    %166 = arith.addf %164, %165 : vector<10x10xf32>
    %cst_57 = arith.constant dense<0.000000e+00> : vector<10xf32>
    %167 = vector.multi_reduction <add>, %166, %cst_57 [1] : vector<10x10xf32> to vector<10xf32>
    %168 = vector.shape_cast %167 : vector<10xf32> to vector<10x1xf32>
    %169 = vector.broadcast %168 : vector<10x1xf32> to vector<10x10xf32>
    %170 = arith.divf %166, %169 : vector<10x10xf32>
    %171 = arith.truncf %170 : vector<10x10xf32> to vector<10x10xbf16>
    %cst_58 = arith.constant dense<0.000000e+00> : vector<10x64xf32>
    %172 = tpu.matmul %171, %14, %cst_58 {dimension_numbers = #tpu.dot_dimension_numbers<[1], [0], [0], [1], [0, 0, 1, 1], [], []>} : vector<10x10xbf16>, vector<10x64xbf16>, vector<10x64xf32> -> vector<10x64xf32>
    %173 = tpu.concatenate %172, %125 in 1 : vector<10x64xf32>, vector<10x64xf32> -> vector<10x128xf32>
    %c128_59 = arith.constant 128 : index
    %c0_60 = arith.constant 0 : index
    %174 = vector.load %arg1[%c128_59, %c0_60] : memref<768x512xbf16, #tpu.memory_space<vmem>>, vector<128x512xbf16>
    %175 = arith.truncf %173 : vector<10x128xf32> to vector<10x128xbf16>
    %cst_61 = arith.constant dense<0.000000e+00> : vector<10x512xf32>
    %176 = tpu.matmul %175, %174, %cst_61 {dimension_numbers = #tpu.dot_dimension_numbers<[1], [0], [0], [1], [0, 0, 1, 1], [], []>} : vector<10x128xbf16>, vector<128x512xbf16>, vector<10x512xf32> -> vector<10x512xf32>
    %c2_62 = arith.constant 2 : index
    %c0_63 = arith.constant 0 : index
    %177 = vector.load %arg2[%c2_62, %c0_63] : memref<16x512xf32, #tpu.memory_space<vmem>>, vector<1x512xf32>
    %178 = vector.broadcast %177 : vector<1x512xf32> to vector<10x512xf32>
    %179 = arith.addf %176, %178 : vector<10x512xf32>
    %180 = vector.extract_strided_slice %179 {offsets = [0, 0], sizes = [10, 64], strides = [1, 1]} : vector<10x512xf32> to vector<10x64xf32>
    %181 = arith.negf %180 : vector<10x64xf32>
    %182 = math.exp %181 : vector<10x64xf32>
    %cst_64 = arith.constant 1.000000e+00 : f32
    %183 = vector.broadcast %cst_64 : f32 to vector<10x64xf32>
    %184 = arith.addf %183, %182 : vector<10x64xf32>
    %185 = arith.divf %183, %184 : vector<10x64xf32>
    %186 = vector.extract_strided_slice %179 {offsets = [0, 128], sizes = [10, 64], strides = [1, 1]} : vector<10x512xf32> to vector<10x64xf32>
    %187 = arith.negf %186 : vector<10x64xf32>
    %188 = math.exp %187 : vector<10x64xf32>
    %cst_65 = arith.constant 1.000000e+00 : f32
    %189 = vector.broadcast %cst_65 : f32 to vector<10x64xf32>
    %190 = arith.addf %189, %188 : vector<10x64xf32>
    %191 = arith.divf %189, %190 : vector<10x64xf32>
    %192 = vector.extract_strided_slice %179 {offsets = [0, 256], sizes = [10, 64], strides = [1, 1]} : vector<10x512xf32> to vector<10x64xf32>
    %193 = vector.extract_strided_slice %179 {offsets = [0, 384], sizes = [10, 64], strides = [1, 1]} : vector<10x512xf32> to vector<10x64xf32>
    %194 = arith.mulf %185, %193 : vector<10x64xf32>
    %195 = arith.addf %192, %194 : vector<10x64xf32>
    %196 = math.tanh %195 : vector<10x64xf32>
    %cst_66 = arith.constant 1.000000e+00 : f32
    %197 = vector.broadcast %cst_66 : f32 to vector<10x64xf32>
    %198 = arith.subf %197, %191 : vector<10x64xf32>
    %199 = arith.mulf %198, %196 : vector<10x64xf32>
    %200 = arith.mulf %191, %125 : vector<10x64xf32>
    %201 = arith.addf %199, %200 : vector<10x64xf32>
    %cst_67 = arith.constant dense<0.000000e+00> : vector<10xf32>
    %202 = vector.multi_reduction <add>, %201, %cst_67 [1] : vector<10x64xf32> to vector<10xf32>
    %203 = vector.shape_cast %202 : vector<10xf32> to vector<10x1xf32>
    %cst_68 = arith.constant 6.400000e+01 : f32
    %204 = vector.broadcast %cst_68 : f32 to vector<10x1xf32>
    %205 = arith.divf %203, %204 : vector<10x1xf32>
    %206 = vector.broadcast %205 : vector<10x1xf32> to vector<10x64xf32>
    %207 = arith.subf %201, %206 : vector<10x64xf32>
    %208 = arith.mulf %207, %207 : vector<10x64xf32>
    %cst_69 = arith.constant dense<0.000000e+00> : vector<10xf32>
    %209 = vector.multi_reduction <add>, %208, %cst_69 [1] : vector<10x64xf32> to vector<10xf32>
    %210 = vector.shape_cast %209 : vector<10xf32> to vector<10x1xf32>
    %cst_70 = arith.constant 6.400000e+01 : f32
    %211 = vector.broadcast %cst_70 : f32 to vector<10x1xf32>
    %212 = arith.divf %210, %211 : vector<10x1xf32>
    %cst_71 = arith.constant 9.99999974E-6 : f32
    %213 = vector.broadcast %cst_71 : f32 to vector<10x1xf32>
    %214 = arith.addf %212, %213 : vector<10x1xf32>
    %215 = math.rsqrt %214 : vector<10x1xf32>
    %216 = vector.broadcast %215 : vector<10x1xf32> to vector<10x64xf32>
    %217 = arith.mulf %207, %216 : vector<10x64xf32>
    %218 = vector.broadcast %3 : vector<1x64xf32> to vector<10x64xf32>
    %219 = arith.mulf %217, %218 : vector<10x64xf32>
    %220 = vector.broadcast %4 : vector<1x64xf32> to vector<10x64xf32>
    %221 = arith.addf %219, %220 : vector<10x64xf32>
    %c256_72 = arith.constant 256 : index
    %c0_73 = arith.constant 0 : index
    %222 = vector.load %arg1[%c256_72, %c0_73] : memref<768x512xbf16, #tpu.memory_space<vmem>>, vector<64x128xbf16>
    %223 = arith.truncf %221 : vector<10x64xf32> to vector<10x64xbf16>
    %cst_74 = arith.constant dense<0.000000e+00> : vector<10x128xf32>
    %224 = tpu.matmul %223, %222, %cst_74 {dimension_numbers = #tpu.dot_dimension_numbers<[1], [0], [0], [1], [0, 0, 1, 1], [], []>} : vector<10x64xbf16>, vector<64x128xbf16>, vector<10x128xf32> -> vector<10x128xf32>
    %c3_75 = arith.constant 3 : index
    %c0_76 = arith.constant 0 : index
    %225 = vector.load %arg2[%c3_75, %c0_76] : memref<16x512xf32, #tpu.memory_space<vmem>>, vector<1x128xf32>
    %226 = vector.broadcast %225 : vector<1x128xf32> to vector<10x128xf32>
    %227 = arith.addf %224, %226 : vector<10x128xf32>
    %cst_77 = arith.constant 0.000000e+00 : f32
    %228 = vector.broadcast %cst_77 : f32 to vector<10x128xf32>
    %229 = arith.maximumf %227, %228 : vector<10x128xf32>
    %c320_78 = arith.constant 320 : index
    %c0_79 = arith.constant 0 : index
    %230 = vector.load %arg1[%c320_78, %c0_79] : memref<768x512xbf16, #tpu.memory_space<vmem>>, vector<128x64xbf16>
    %231 = arith.truncf %229 : vector<10x128xf32> to vector<10x128xbf16>
    %cst_80 = arith.constant dense<0.000000e+00> : vector<10x64xf32>
    %232 = tpu.matmul %231, %230, %cst_80 {dimension_numbers = #tpu.dot_dimension_numbers<[1], [0], [0], [1], [0, 0, 1, 1], [], []>} : vector<10x128xbf16>, vector<128x64xbf16>, vector<10x64xf32> -> vector<10x64xf32>
    %233 = arith.addf %201, %232 : vector<10x64xf32>
    %c4_81 = arith.constant 4 : index
    %c0_82 = arith.constant 0 : index
    %234 = vector.load %arg2[%c4_81, %c0_82] : memref<16x512xf32, #tpu.memory_space<vmem>>, vector<1x64xf32>
    %235 = vector.broadcast %234 : vector<1x64xf32> to vector<10x64xf32>
    %236 = arith.addf %233, %235 : vector<10x64xf32>
    %cst_83 = arith.constant dense<0.000000e+00> : vector<10xf32>
    %237 = vector.multi_reduction <add>, %236, %cst_83 [1] : vector<10x64xf32> to vector<10xf32>
    %238 = vector.shape_cast %237 : vector<10xf32> to vector<10x1xf32>
    %cst_84 = arith.constant 6.400000e+01 : f32
    %239 = vector.broadcast %cst_84 : f32 to vector<10x1xf32>
    %240 = arith.divf %238, %239 : vector<10x1xf32>
    %241 = vector.broadcast %240 : vector<10x1xf32> to vector<10x64xf32>
    %242 = arith.subf %236, %241 : vector<10x64xf32>
    %243 = arith.mulf %242, %242 : vector<10x64xf32>
    %cst_85 = arith.constant dense<0.000000e+00> : vector<10xf32>
    %244 = vector.multi_reduction <add>, %243, %cst_85 [1] : vector<10x64xf32> to vector<10xf32>
    %245 = vector.shape_cast %244 : vector<10xf32> to vector<10x1xf32>
    %cst_86 = arith.constant 6.400000e+01 : f32
    %246 = vector.broadcast %cst_86 : f32 to vector<10x1xf32>
    %247 = arith.divf %245, %246 : vector<10x1xf32>
    %cst_87 = arith.constant 9.99999974E-6 : f32
    %248 = vector.broadcast %cst_87 : f32 to vector<10x1xf32>
    %249 = arith.addf %247, %248 : vector<10x1xf32>
    %250 = math.rsqrt %249 : vector<10x1xf32>
    %251 = vector.broadcast %250 : vector<10x1xf32> to vector<10x64xf32>
    %252 = arith.mulf %242, %251 : vector<10x64xf32>
    %253 = vector.broadcast %1 : vector<1x64xf32> to vector<10x64xf32>
    %254 = arith.mulf %252, %253 : vector<10x64xf32>
    %255 = vector.broadcast %2 : vector<1x64xf32> to vector<10x64xf32>
    %256 = arith.addf %254, %255 : vector<10x64xf32>
    %c64_88 = arith.constant 64 : index
    %c0_89 = arith.constant 0 : index
    %257 = vector.load %arg1[%c64_88, %c0_89] : memref<768x512xbf16, #tpu.memory_space<vmem>>, vector<64x64xbf16>
    %258 = arith.truncf %256 : vector<10x64xf32> to vector<10x64xbf16>
    %cst_90 = arith.constant dense<0.000000e+00> : vector<10x64xf32>
    %259 = tpu.matmul %258, %257, %cst_90 {dimension_numbers = #tpu.dot_dimension_numbers<[1], [0], [0], [1], [0, 0, 1, 1], [], []>} : vector<10x64xbf16>, vector<64x64xbf16>, vector<10x64xf32> -> vector<10x64xf32>
    %c1_91 = arith.constant 1 : index
    %c0_92 = arith.constant 0 : index
    %260 = vector.load %arg2[%c1_91, %c0_92] : memref<16x512xf32, #tpu.memory_space<vmem>>, vector<1x64xf32>
    %261 = vector.broadcast %260 : vector<1x64xf32> to vector<10x64xf32>
    %262 = arith.addf %259, %261 : vector<10x64xf32>
    %263 = arith.truncf %262 : vector<10x64xf32> to vector<10x64xbf16>
    %cst_93 = arith.constant dense<0.000000e+00> : vector<10x10xf32>
    %264 = tpu.matmul %12, %263, %cst_93 {dimension_numbers = #tpu.dot_dimension_numbers<[1], [1], [0], [0], [0, 0, 1, 0], [], []>} : vector<10x64xbf16>, vector<10x64xbf16>, vector<10x10xf32> -> vector<10x10xf32>
    %cst_94 = arith.constant 1.250000e-01 : f32
    %265 = vector.broadcast %cst_94 : f32 to vector<10x10xf32>
    %266 = arith.mulf %264, %265 : vector<10x10xf32>
    %cst_95 = arith.constant dense<0xFF800000> : vector<10xf32>
    %267 = vector.multi_reduction <maximumf>, %266, %cst_95 [0] : vector<10x10xf32> to vector<10xf32>
    %268 = vector.shape_cast %267 : vector<10xf32> to vector<1x10xf32>
    %269 = vector.broadcast %268 : vector<1x10xf32> to vector<10x10xf32>
    %270 = arith.subf %266, %269 : vector<10x10xf32>
    %271 = math.exp %270 : vector<10x10xf32>
    %cst_96 = arith.constant dense<0.000000e+00> : vector<10xf32>
    %272 = vector.multi_reduction <add>, %271, %cst_96 [0] : vector<10x10xf32> to vector<10xf32>
    %273 = vector.shape_cast %272 : vector<10xf32> to vector<1x10xf32>
    %274 = vector.broadcast %273 : vector<1x10xf32> to vector<10x10xf32>
    %275 = arith.divf %271, %274 : vector<10x10xf32>
    %cst_97 = arith.constant 9.99999993E-9 : f32
    %276 = vector.broadcast %cst_97 : f32 to vector<10x10xf32>
    %277 = arith.addf %275, %276 : vector<10x10xf32>
    %cst_98 = arith.constant dense<0.000000e+00> : vector<10xf32>
    %278 = vector.multi_reduction <add>, %277, %cst_98 [1] : vector<10x10xf32> to vector<10xf32>
    %279 = vector.shape_cast %278 : vector<10xf32> to vector<10x1xf32>
    %280 = vector.broadcast %279 : vector<10x1xf32> to vector<10x10xf32>
    %281 = arith.divf %277, %280 : vector<10x10xf32>
    %282 = arith.truncf %281 : vector<10x10xf32> to vector<10x10xbf16>
    %cst_99 = arith.constant dense<0.000000e+00> : vector<10x64xf32>
    %283 = tpu.matmul %282, %14, %cst_99 {dimension_numbers = #tpu.dot_dimension_numbers<[1], [0], [0], [1], [0, 0, 1, 1], [], []>} : vector<10x10xbf16>, vector<10x64xbf16>, vector<10x64xf32> -> vector<10x64xf32>
    %284 = tpu.concatenate %283, %236 in 1 : vector<10x64xf32>, vector<10x64xf32> -> vector<10x128xf32>
    %c128_100 = arith.constant 128 : index
    %c0_101 = arith.constant 0 : index
    %285 = vector.load %arg1[%c128_100, %c0_101] : memref<768x512xbf16, #tpu.memory_space<vmem>>, vector<128x512xbf16>
    %286 = arith.truncf %284 : vector<10x128xf32> to vector<10x128xbf16>
    %cst_102 = arith.constant dense<0.000000e+00> : vector<10x512xf32>
    %287 = tpu.matmul %286, %285, %cst_102 {dimension_numbers = #tpu.dot_dimension_numbers<[1], [0], [0], [1], [0, 0, 1, 1], [], []>} : vector<10x128xbf16>, vector<128x512xbf16>, vector<10x512xf32> -> vector<10x512xf32>
    %c2_103 = arith.constant 2 : index
    %c0_104 = arith.constant 0 : index
    %288 = vector.load %arg2[%c2_103, %c0_104] : memref<16x512xf32, #tpu.memory_space<vmem>>, vector<1x512xf32>
    %289 = vector.broadcast %288 : vector<1x512xf32> to vector<10x512xf32>
    %290 = arith.addf %287, %289 : vector<10x512xf32>
    %291 = vector.extract_strided_slice %290 {offsets = [0, 0], sizes = [10, 64], strides = [1, 1]} : vector<10x512xf32> to vector<10x64xf32>
    %292 = arith.negf %291 : vector<10x64xf32>
    %293 = math.exp %292 : vector<10x64xf32>
    %cst_105 = arith.constant 1.000000e+00 : f32
    %294 = vector.broadcast %cst_105 : f32 to vector<10x64xf32>
    %295 = arith.addf %294, %293 : vector<10x64xf32>
    %296 = arith.divf %294, %295 : vector<10x64xf32>
    %297 = vector.extract_strided_slice %290 {offsets = [0, 128], sizes = [10, 64], strides = [1, 1]} : vector<10x512xf32> to vector<10x64xf32>
    %298 = arith.negf %297 : vector<10x64xf32>
    %299 = math.exp %298 : vector<10x64xf32>
    %cst_106 = arith.constant 1.000000e+00 : f32
    %300 = vector.broadcast %cst_106 : f32 to vector<10x64xf32>
    %301 = arith.addf %300, %299 : vector<10x64xf32>
    %302 = arith.divf %300, %301 : vector<10x64xf32>
    %303 = vector.extract_strided_slice %290 {offsets = [0, 256], sizes = [10, 64], strides = [1, 1]} : vector<10x512xf32> to vector<10x64xf32>
    %304 = vector.extract_strided_slice %290 {offsets = [0, 384], sizes = [10, 64], strides = [1, 1]} : vector<10x512xf32> to vector<10x64xf32>
    %305 = arith.mulf %296, %304 : vector<10x64xf32>
    %306 = arith.addf %303, %305 : vector<10x64xf32>
    %307 = math.tanh %306 : vector<10x64xf32>
    %cst_107 = arith.constant 1.000000e+00 : f32
    %308 = vector.broadcast %cst_107 : f32 to vector<10x64xf32>
    %309 = arith.subf %308, %302 : vector<10x64xf32>
    %310 = arith.mulf %309, %307 : vector<10x64xf32>
    %311 = arith.mulf %302, %236 : vector<10x64xf32>
    %312 = arith.addf %310, %311 : vector<10x64xf32>
    %cst_108 = arith.constant dense<0.000000e+00> : vector<10xf32>
    %313 = vector.multi_reduction <add>, %312, %cst_108 [1] : vector<10x64xf32> to vector<10xf32>
    %314 = vector.shape_cast %313 : vector<10xf32> to vector<10x1xf32>
    %cst_109 = arith.constant 6.400000e+01 : f32
    %315 = vector.broadcast %cst_109 : f32 to vector<10x1xf32>
    %316 = arith.divf %314, %315 : vector<10x1xf32>
    %317 = vector.broadcast %316 : vector<10x1xf32> to vector<10x64xf32>
    %318 = arith.subf %312, %317 : vector<10x64xf32>
    %319 = arith.mulf %318, %318 : vector<10x64xf32>
    %cst_110 = arith.constant dense<0.000000e+00> : vector<10xf32>
    %320 = vector.multi_reduction <add>, %319, %cst_110 [1] : vector<10x64xf32> to vector<10xf32>
    %321 = vector.shape_cast %320 : vector<10xf32> to vector<10x1xf32>
    %cst_111 = arith.constant 6.400000e+01 : f32
    %322 = vector.broadcast %cst_111 : f32 to vector<10x1xf32>
    %323 = arith.divf %321, %322 : vector<10x1xf32>
    %cst_112 = arith.constant 9.99999974E-6 : f32
    %324 = vector.broadcast %cst_112 : f32 to vector<10x1xf32>
    %325 = arith.addf %323, %324 : vector<10x1xf32>
    %326 = math.rsqrt %325 : vector<10x1xf32>
    %327 = vector.broadcast %326 : vector<10x1xf32> to vector<10x64xf32>
    %328 = arith.mulf %318, %327 : vector<10x64xf32>
    %329 = vector.broadcast %3 : vector<1x64xf32> to vector<10x64xf32>
    %330 = arith.mulf %328, %329 : vector<10x64xf32>
    %331 = vector.broadcast %4 : vector<1x64xf32> to vector<10x64xf32>
    %332 = arith.addf %330, %331 : vector<10x64xf32>
    %c256_113 = arith.constant 256 : index
    %c0_114 = arith.constant 0 : index
    %333 = vector.load %arg1[%c256_113, %c0_114] : memref<768x512xbf16, #tpu.memory_space<vmem>>, vector<64x128xbf16>
    %334 = arith.truncf %332 : vector<10x64xf32> to vector<10x64xbf16>
    %cst_115 = arith.constant dense<0.000000e+00> : vector<10x128xf32>
    %335 = tpu.matmul %334, %333, %cst_115 {dimension_numbers = #tpu.dot_dimension_numbers<[1], [0], [0], [1], [0, 0, 1, 1], [], []>} : vector<10x64xbf16>, vector<64x128xbf16>, vector<10x128xf32> -> vector<10x128xf32>
    %c3_116 = arith.constant 3 : index
    %c0_117 = arith.constant 0 : index
    %336 = vector.load %arg2[%c3_116, %c0_117] : memref<16x512xf32, #tpu.memory_space<vmem>>, vector<1x128xf32>
    %337 = vector.broadcast %336 : vector<1x128xf32> to vector<10x128xf32>
    %338 = arith.addf %335, %337 : vector<10x128xf32>
    %cst_118 = arith.constant 0.000000e+00 : f32
    %339 = vector.broadcast %cst_118 : f32 to vector<10x128xf32>
    %340 = arith.maximumf %338, %339 : vector<10x128xf32>
    %c320_119 = arith.constant 320 : index
    %c0_120 = arith.constant 0 : index
    %341 = vector.load %arg1[%c320_119, %c0_120] : memref<768x512xbf16, #tpu.memory_space<vmem>>, vector<128x64xbf16>
    %342 = arith.truncf %340 : vector<10x128xf32> to vector<10x128xbf16>
    %cst_121 = arith.constant dense<0.000000e+00> : vector<10x64xf32>
    %343 = tpu.matmul %342, %341, %cst_121 {dimension_numbers = #tpu.dot_dimension_numbers<[1], [0], [0], [1], [0, 0, 1, 1], [], []>} : vector<10x128xbf16>, vector<128x64xbf16>, vector<10x64xf32> -> vector<10x64xf32>
    %344 = arith.addf %312, %343 : vector<10x64xf32>
    %c4_122 = arith.constant 4 : index
    %c0_123 = arith.constant 0 : index
    %345 = vector.load %arg2[%c4_122, %c0_123] : memref<16x512xf32, #tpu.memory_space<vmem>>, vector<1x64xf32>
    %346 = vector.broadcast %345 : vector<1x64xf32> to vector<10x64xf32>
    %347 = arith.addf %344, %346 : vector<10x64xf32>
    %c448 = arith.constant 448 : index
    %c0_124 = arith.constant 0 : index
    %348 = vector.load %arg1[%c448, %c0_124] : memref<768x512xbf16, #tpu.memory_space<vmem>>, vector<64x256xbf16>
    %349 = arith.truncf %347 : vector<10x64xf32> to vector<10x64xbf16>
    %cst_125 = arith.constant dense<0.000000e+00> : vector<10x256xf32>
    %350 = tpu.matmul %349, %348, %cst_125 {dimension_numbers = #tpu.dot_dimension_numbers<[1], [0], [0], [1], [0, 0, 1, 1], [], []>} : vector<10x64xbf16>, vector<64x256xbf16>, vector<10x256xf32> -> vector<10x256xf32>
    %c5 = arith.constant 5 : index
    %c0_126 = arith.constant 0 : index
    %351 = vector.load %arg2[%c5, %c0_126] : memref<16x512xf32, #tpu.memory_space<vmem>>, vector<1x256xf32>
    %352 = vector.broadcast %351 : vector<1x256xf32> to vector<10x256xf32>
    %353 = arith.addf %350, %352 : vector<10x256xf32>
    %cst_127 = arith.constant 0.000000e+00 : f32
    %354 = vector.broadcast %cst_127 : f32 to vector<10x256xf32>
    %355 = arith.maximumf %353, %354 : vector<10x256xf32>
    %c512 = arith.constant 512 : index
    %c0_128 = arith.constant 0 : index
    %356 = vector.load %arg1[%c512, %c0_128] : memref<768x512xbf16, #tpu.memory_space<vmem>>, vector<256x256xbf16>
    %357 = arith.truncf %355 : vector<10x256xf32> to vector<10x256xbf16>
    %cst_129 = arith.constant dense<0.000000e+00> : vector<10x256xf32>
    %358 = tpu.matmul %357, %356, %cst_129 {dimension_numbers = #tpu.dot_dimension_numbers<[1], [0], [0], [1], [0, 0, 1, 1], [], []>} : vector<10x256xbf16>, vector<256x256xbf16>, vector<10x256xf32> -> vector<10x256xf32>
    %c6 = arith.constant 6 : index
    %c0_130 = arith.constant 0 : index
    %359 = vector.load %arg2[%c6, %c0_130] : memref<16x512xf32, #tpu.memory_space<vmem>>, vector<1x256xf32>
    %360 = vector.broadcast %359 : vector<1x256xf32> to vector<10x256xf32>
    %361 = arith.addf %358, %360 : vector<10x256xf32>
    %cst_131 = arith.constant dense<0xFF800000> : vector<256xf32>
    %362 = vector.multi_reduction <maximumf>, %361, %cst_131 [0] : vector<10x256xf32> to vector<256xf32>
    %363 = vector.shape_cast %362 : vector<256xf32> to vector<1x256xf32>
    %364 = vector.extract_strided_slice %363 {offsets = [0, 0], sizes = [1, 64], strides = [1, 1]} : vector<1x256xf32> to vector<1x64xf32>
    %c0_132 = arith.constant 0 : index
    %c0_133 = arith.constant 0 : index
    %365 = vector.load %arg3[%c0_132, %c0_133] : memref<4x64xf32, #tpu.memory_space<vmem>>, vector<1x64xf32>
    tpu.vector_store %arg3[%c0_132, %c0_133], %364 {strides = array<i32>} : memref<4x64xf32, #tpu.memory_space<vmem>>, vector<1x64xf32>,
    %366 = vector.extract_strided_slice %363 {offsets = [0, 64], sizes = [1, 64], strides = [1, 1]} : vector<1x256xf32> to vector<1x64xf32>
    %c1_134 = arith.constant 1 : index
    %c0_135 = arith.constant 0 : index
    %367 = vector.load %arg3[%c1_134, %c0_135] : memref<4x64xf32, #tpu.memory_space<vmem>>, vector<1x64xf32>
    tpu.vector_store %arg3[%c1_134, %c0_135], %366 {strides = array<i32>} : memref<4x64xf32, #tpu.memory_space<vmem>>, vector<1x64xf32>,
    %368 = vector.extract_strided_slice %363 {offsets = [0, 128], sizes = [1, 64], strides = [1, 1]} : vector<1x256xf32> to vector<1x64xf32>
    %c2_136 = arith.constant 2 : index
    %c0_137 = arith.constant 0 : index
    %369 = vector.load %arg3[%c2_136, %c0_137] : memref<4x64xf32, #tpu.memory_space<vmem>>, vector<1x64xf32>
    tpu.vector_store %arg3[%c2_136, %c0_137], %368 {strides = array<i32>} : memref<4x64xf32, #tpu.memory_space<vmem>>, vector<1x64xf32>,
    %370 = vector.extract_strided_slice %363 {offsets = [0, 192], sizes = [1, 64], strides = [1, 1]} : vector<1x256xf32> to vector<1x64xf32>
    %c3_138 = arith.constant 3 : index
    %c0_139 = arith.constant 0 : index
    %371 = vector.load %arg3[%c3_138, %c0_139] : memref<4x64xf32, #tpu.memory_space<vmem>>, vector<1x64xf32>
    tpu.vector_store %arg3[%c3_138, %c0_139], %370 {strides = array<i32>} : memref<4x64xf32, #tpu.memory_space<vmem>>, vector<1x64xf32>,
    return
  }
}

</mosaic_0001>

<llo_original>
// kernel: tpu_custom_call.1
$region0: #{tpu_custom_call.1}
  #allocation0 [shape = 'u32[]', space=smem, size = 0x4, offset = 0x4, fixed_abs, tag = 'smem constant byte address 0x4 - core index']
  #allocation1 [shape = 'u32[144,128]{1,0:T(1,128)}', space=vmem, size = 0x12000, scoped, tag = 'internal scratch']
  %s0 = inlined_call_operand.hbm [shape: f32[10,64], index: 0, kind: input, shape index: {}]
  %s1 = inlined_call_operand.hbm [shape: bf16[768,512], index: 1, kind: input, shape index: {}]
  %s2 = inlined_call_operand.hbm [shape: f32[16,512], index: 2, kind: input, shape index: {}]
  %s3 = inlined_call_operand.hbm [shape: f32[4,64], index: 3, kind: output, shape index: {}]
  %s4 = sld [smem:[#allocation0]]
  $region34: #{tpu_custom_call.1} parent=0
    _
  %s6 = ssub.s32 1, %s4
  %s7 = scalar_select 0, %s6, %s4
  $region1: #{tpu_custom_call.1} parent=0
    #allocation2 [shape = 'u8[8192]{0}', space=vmem, size = 0x2000, scoped, tag = 'input window, operand 0, single buffered']
    #allocation3 [shape = 's32[1]{0}', space=sflag, size = 0x4, scoped, tag = 'scoped memory for tpu_custom_call.1']
    #allocation4 [shape = 's32[1]{0}', space=sflag, size = 0x4, scoped, tag = 'scoped memory for tpu_custom_call.1']
    #allocation5 [shape = 'u8[786432]{0}', space=vmem, size = 0xc0000, scoped, tag = 'input window, operand 1, single buffered']
    #allocation6 [shape = 's32[1]{0}', space=sflag, size = 0x4, scoped, tag = 'scoped memory for tpu_custom_call.1']
    #allocation7 [shape = 'u8[32768]{0}', space=vmem, size = 0x8000, scoped, tag = 'input window, operand 2, single buffered']
    #allocation8 [shape = 'u8[2048]{0}', space=vmem, size = 0x800, scoped, tag = 'output window, operand 0, single buffered']
    %8 = vsyncpa [#allocation3], 0
    %9 = vsyncpa [#allocation6], 0
    %10 = vsyncpa [#allocation4], 0
    // Predicated region
    $region2: #{tpu_custom_call.1} parent=1 // pred_check
      _
    $region3: #{tpu_custom_call.1} parent=1 // pred_check_branch
      %12 = sbr.rel (0) target = $region5
    $region4: #{tpu_custom_call.1} parent=1 // pred_region
      %s14 = ssub.s32 256, 256
      %15 = vsyncadd [#allocation3], %s14
      %s16 = sshll.u32 [#allocation2], 4
      %s17 = int_to_ptr.vmem [resolvable:$true] %s16
      %22 = dma.hbm_to_vmem [thread:$0]  %s0, 256, %s17, [#allocation3], 128, 128, 8
    $region5: #{tpu_custom_call.1} parent=1 // pred_fallthru
      _
    // Predicated region
    $region6: #{tpu_custom_call.1} parent=1 // pred_check
      _
    $region7: #{tpu_custom_call.1} parent=1 // pred_check_branch
      %24 = sbr.rel (0) target = $region9
    $region8: #{tpu_custom_call.1} parent=1 // pred_region
      %s26 = ssub.s32 24576, 24576
      %27 = vsyncadd [#allocation6], %s26
      %s28 = sshll.u32 [#allocation5], 4
      %s29 = int_to_ptr.vmem [resolvable:$true] %s28
      %34 = dma.hbm_to_vmem [thread:$0]  %s1, 24576, %s29, [#allocation6], 256, 256, 16
    $region9: #{tpu_custom_call.1} parent=1 // pred_fallthru
      _
    // Predicated region
    $region10: #{tpu_custom_call.1} parent=1 // pred_check
      _
    $region11: #{tpu_custom_call.1} parent=1 // pred_check_branch
      %36 = sbr.rel (0) target = $region13
    $region12: #{tpu_custom_call.1} parent=1 // pred_region
      %s38 = ssub.s32 1024, 1024
      %39 = vsyncadd [#allocation6], %s38
      %s40 = sshll.u32 [#allocation7], 4
      %s41 = int_to_ptr.vmem [resolvable:$true] %s40
      %46 = dma.hbm_to_vmem [thread:$0]  %s2, 1024, %s41, [#allocation6], 512, 512, 32
    $region13: #{tpu_custom_call.1} parent=1 // pred_fallthru
      _
    // Predicated region
    $region14: #{tpu_custom_call.1} parent=1 // pred_check
      _
    $region15: #{tpu_custom_call.1} parent=1 // pred_check_branch
      %48 = sbr.rel (0) target = $region17
    $region16: #{tpu_custom_call.1} parent=1 // pred_region
      %49 = dma.done [#allocation3], 256
    $region17: #{tpu_custom_call.1} parent=1 // pred_fallthru
      _
    // Predicated region
    $region18: #{tpu_custom_call.1} parent=1 // pred_check
      _
    $region19: #{tpu_custom_call.1} parent=1 // pred_check_branch
      %51 = sbr.rel (0) target = $region21
    $region20: #{tpu_custom_call.1} parent=1 // pred_region
      %52 = dma.done [#allocation6], 24576
    $region21: #{tpu_custom_call.1} parent=1 // pred_fallthru
      _
    // Predicated region
    $region22: #{tpu_custom_call.1} parent=1 // pred_check
      _
    $region23: #{tpu_custom_call.1} parent=1 // pred_check_branch
      %54 = sbr.rel (0) target = $region25
    $region24: #{tpu_custom_call.1} parent=1 // pred_region
      %55 = dma.done [#allocation6], 1024
    $region25: #{tpu_custom_call.1} parent=1 // pred_fallthru
      _
    %v57 = vld [vmem:[#allocation2] sm:$0xff]
    %v58 = vld [vmem:[#allocation2 + $0x8] sm:$0x3]
    %v59 = vld [vmem:[#allocation7 + $0x20] ss:$0 sm:$0xff]
    %v60 = vld [vmem:[#allocation7 + $0x21] ss:$0 sm:$0xff]
    %v61 = vld [vmem:[#allocation7 + $0x22] ss:$0 sm:$0xff]
    %v62 = vld [vmem:[#allocation7 + $0x23] ss:$0 sm:$0xff]
    %v63 = vld [vmem:[#allocation5] sm:$0xf]
    %v64 = vld [vmem:[#allocation5 + $0x10] sm:$0xf]
    %v65 = vld [vmem:[#allocation5 + $0x20] sm:$0xf]
    %v66 = vld [vmem:[#allocation5 + $0x30] sm:$0xf]
    %v67 = vld [vmem:[#allocation5 + $0x40] sm:$0xf]
    %v68 = vld [vmem:[#allocation5 + $0x50] sm:$0xf]
    %v69 = vld [vmem:[#allocation5 + $0x60] sm:$0xf]
    %v70 = vld [vmem:[#allocation5 + $0x70] sm:$0xf]
    %v71 = vpack.c.bf16 %v58, %v57
    %v72 = vld [vmem:[#allocation7] ss:$0 sm:$0xff]
    %v81 = vunpack.c.l.b16 %v63
    %v82 = vunpack.c.l.b16 %v64
    %v83 = vunpack.c.l.b16 %v65
    %v84 = vunpack.c.l.b16 %v66
    %v85 = vunpack.c.l.b16 %v67
    %v86 = vunpack.c.l.b16 %v68
    %v87 = vunpack.c.l.b16 %v69
    %v88 = vunpack.c.l.b16 %v70
    %v89 = vpack.c.b16 %v82, %v81
    %v90 = vpack.c.b16 %v84, %v83
    %v91 = vpack.c.b16 %v86, %v85
    %v92 = vpack.c.b16 %v88, %v87
    %vm97 = vcmask 523264
    %v99 = vsel %vm97, %v71, 0
    %101 = vmatprep.subr.bf16.mxu0 0
    %102 = vmatpush1.bf16.msra.mxu0 %v89
    %103 = vmatprep.subr.bf16.mxu0 0
    %104 = vmatpush1.bf16.msra.mxu0 %v90
    %105 = vmatprep.subr.bf16.mxu0 0
    %106 = vmatpush1.bf16.msra.mxu0 %v91
    %107 = vmatprep.subr.bf16.mxu0 0
    %108 = vmatpush1.bf16.msra.mxu0 %v92
    %109 = vmatprep.subr.bf16.mxu0 0
    %110 = vmatpush1.bf16.msra.mxu0 0
    %111 = vmatprep.subr.bf16.mxu0 0
    %112 = vmatpush1.bf16.msra.mxu0 0
    %113 = vmatprep.subr.bf16.mxu0 0
    %114 = vmatpush1.bf16.msra.mxu0 0
    %115 = vmatprep.subr.bf16.mxu0 0
    %116 = vmatpush1.bf16.msra.mxu0 0
    %117 = vmatprep.subr.bf16.mxu0 0
    %118 = vmatpush1.bf16.msra.mxu0 0
    %119 = vmatprep.subr.bf16.mxu0 0
    %120 = vmatpush1.bf16.msra.mxu0 0
    %121 = vmatprep.subr.bf16.mxu0 0
    %122 = vmatpush1.bf16.msra.mxu0 0
    %123 = vmatprep.subr.bf16.mxu0 0
    %124 = vmatpush1.bf16.msra.mxu0 0
    %125 = vmatprep.subr.bf16.mxu0 0
    %126 = vmatpush1.bf16.msra.mxu0 0
    %127 = vmatprep.subr.bf16.mxu0 0
    %128 = vmatpush1.bf16.msra.mxu0 0
    %129 = vmatprep.subr.bf16.mxu0 0
    %130 = vmatpush1.bf16.msra.mxu0 0
    %131 = vmatprep.subr.bf16.mxu0 0
    %132 = vmatpush1.bf16.msra.mxu0 0
    %133 = vmatprep.mubr.bf16.mxu0 0
    %134 = vmatmul.mubr.bf16.gmra.mrb[0].mxu0 %v99
    %v135 = vpop.f32.mrb[0].mxu0
    %v136 = vadd.f32 %v72, %v135
    %v137 = vpop.f32.mrb[0].mxu0
    %v138 = vpop.f32.mrb[0].mxu0
    %v139 = vadd.f32 %v72, %v138
    %v140 = vpop.f32.mrb[0].mxu0
    %141 = vdwg.mxu0
    %v142 = vpack.c.bf16 %v139, %v136
    %v143 = vsel %vm97, %v57, 0.0
    %144 = vadd.xlane.f32.xlu0 %v143
    %v145 = vpop.xlane.xlu0 %144
    %vm146 = vcmask 517120
    %v147 = vsel %vm146, %v58, 0.0
    %148 = vadd.xlane.f32.xlu0 %v147
    %v149 = vpop.xlane.xlu0 %148
    %v150 = vrcp.pop 64.0
    %v151 = vmul.f32 %v145, %v150
    %v152 = vmul.f32 %v149, %v150
    %v153 = vsub.f32 %v57, %v151
    %v154 = vsub.f32 %v58, %v152
    %v155 = vmul.f32 %v153, %v153
    %v156 = vmul.f32 %v154, %v154
    %v157 = vsel %vm97, %v155, 0.0
    %158 = vadd.xlane.f32.xlu0 %v157
    %v159 = vpop.xlane.xlu0 %158
    %v160 = vsel %vm146, %v156, 0.0
    %161 = vadd.xlane.f32.xlu0 %v160
    %v162 = vpop.xlane.xlu0 %161
    %v163 = vmul.f32 %v159, %v150
    %v164 = vmul.f32 %v162, %v150
    %v165 = vadd.f32 %v163, 1e-05
    %v166 = vadd.f32 %v164, 1e-05
    %v167 = vrsqrt.pop %v165
    %v168 = vrsqrt.pop %v166
    %v169 = vmul.f32 %v153, %v167
    %v170 = vmul.f32 %v154, %v168
    %v171 = vmul.f32 %v169, %v59
    %v172 = vmul.f32 %v170, %v59
    %v173 = vadd.f32 %v171, %v60
    %v174 = vadd.f32 %v172, %v60
    %v175 = vld [vmem:[#allocation5 + $0x80] sm:$0xf]
    %v176 = vld [vmem:[#allocation5 + $0x90] sm:$0xf]
    %v177 = vld [vmem:[#allocation5 + $0xa0] sm:$0xf]
    %v178 = vld [vmem:[#allocation5 + $0xb0] sm:$0xf]
    %v179 = vld [vmem:[#allocation5 + $0xc0] sm:$0xf]
    %v180 = vld [vmem:[#allocation5 + $0xd0] sm:$0xf]
    %v181 = vld [vmem:[#allocation5 + $0xe0] sm:$0xf]
    %v182 = vld [vmem:[#allocation5 + $0xf0] sm:$0xf]
    %v183 = vpack.c.bf16 %v174, %v173
    %v184 = vld [vmem:[#allocation7 + $0x1] ss:$0 sm:$0xff]
    %v193 = vunpack.c.l.b16 %v175
    %v194 = vunpack.c.l.b16 %v176
    %v195 = vunpack.c.l.b16 %v177
    %v196 = vunpack.c.l.b16 %v178
    %v197 = vunpack.c.l.b16 %v179
    %v198 = vunpack.c.l.b16 %v180
    %v199 = vunpack.c.l.b16 %v181
    %v200 = vunpack.c.l.b16 %v182
    %v201 = vpack.c.b16 %v194, %v193
    %v202 = vpack.c.b16 %v196, %v195
    %v203 = vpack.c.b16 %v198, %v197
    %v204 = vpack.c.b16 %v200, %v199
    %v210 = vsel %vm97, %v183, 0
    %212 = vmatprep.subr.bf16.mxu0 0
    %213 = vmatpush1.bf16.msra.mxu0 %v201
    %214 = vmatprep.subr.bf16.mxu0 0
    %215 = vmatpush1.bf16.msra.mxu0 %v202
    %216 = vmatprep.subr.bf16.mxu0 0
    %217 = vmatpush1.bf16.msra.mxu0 %v203
    %218 = vmatprep.subr.bf16.mxu0 0
    %219 = vmatpush1.bf16.msra.mxu0 %v204
    %220 = vmatprep.subr.bf16.mxu0 0
    %221 = vmatpush1.bf16.msra.mxu0 0
    %222 = vmatprep.subr.bf16.mxu0 0
    %223 = vmatpush1.bf16.msra.mxu0 0
    %224 = vmatprep.subr.bf16.mxu0 0
    %225 = vmatpush1.bf16.msra.mxu0 0
    %226 = vmatprep.subr.bf16.mxu0 0
    %227 = vmatpush1.bf16.msra.mxu0 0
    %228 = vmatprep.subr.bf16.mxu0 0
    %229 = vmatpush1.bf16.msra.mxu0 0
    %230 = vmatprep.subr.bf16.mxu0 0
    %231 = vmatpush1.bf16.msra.mxu0 0
    %232 = vmatprep.subr.bf16.mxu0 0
    %233 = vmatpush1.bf16.msra.mxu0 0
    %234 = vmatprep.subr.bf16.mxu0 0
    %235 = vmatpush1.bf16.msra.mxu0 0
    %236 = vmatprep.subr.bf16.mxu0 0
    %237 = vmatpush1.bf16.msra.mxu0 0
    %238 = vmatprep.subr.bf16.mxu0 0
    %239 = vmatpush1.bf16.msra.mxu0 0
    %240 = vmatprep.subr.bf16.mxu0 0
    %241 = vmatpush1.bf16.msra.mxu0 0
    %242 = vmatprep.subr.bf16.mxu0 0
    %243 = vmatpush1.bf16.msra.mxu0 0
    %244 = vmatprep.mubr.bf16.mxu0 0
    %245 = vmatmul.mubr.bf16.gmra.mrb[0].mxu0 %v210
    %v246 = vpop.f32.mrb[0].mxu0
    %v247 = vadd.f32 %v184, %v246
    %v248 = vpop.f32.mrb[0].mxu0
    %v249 = vpop.f32.mrb[0].mxu0
    %v250 = vadd.f32 %v184, %v249
    %v251 = vpop.f32.mrb[0].mxu0
    %252 = vdwg.mxu0
    %v253 = vpack.c.bf16 %v250, %v247
    %v255 = vsel %vm97, %v142, 0
    %v258 = vsel %vm97, %v253, 0
    %260 = vmatprep.subr.bf16.mxu0 0
    %261 = vmatpush1.bf16.xpose.msra.mxu0 %v258
    %262 = vmatprep.subr.bf16.mxu0 0
    %263 = vmatpush1.bf16.xpose.msra.mxu0 0
    %264 = vmatprep.subr.bf16.mxu0 0
    %265 = vmatpush1.bf16.xpose.msra.mxu0 0
    %266 = vmatprep.subr.bf16.mxu0 0
    %267 = vmatpush1.bf16.xpose.msra.mxu0 0
    %268 = vmatprep.subr.bf16.mxu0 0
    %269 = vmatpush1.bf16.xpose.msra.mxu0 0
    %270 = vmatprep.subr.bf16.mxu0 0
    %271 = vmatpush1.bf16.xpose.msra.mxu0 0
    %272 = vmatprep.subr.bf16.mxu0 0
    %273 = vmatpush1.bf16.xpose.msra.mxu0 0
    %274 = vmatprep.subr.bf16.mxu0 0
    %275 = vmatpush1.bf16.xpose.msra.mxu0 0
    %276 = vmatprep.subr.bf16.mxu0 0
    %277 = vmatpush1.bf16.xpose.msra.mxu0 0
    %278 = vmatprep.subr.bf16.mxu0 0
    %279 = vmatpush1.bf16.xpose.msra.mxu0 0
    %280 = vmatprep.subr.bf16.mxu0 0
    %281 = vmatpush1.bf16.xpose.msra.mxu0 0
    %282 = vmatprep.subr.bf16.mxu0 0
    %283 = vmatpush1.bf16.xpose.msra.mxu0 0
    %284 = vmatprep.subr.bf16.mxu0 0
    %285 = vmatpush1.bf16.xpose.msra.mxu0 0
    %286 = vmatprep.subr.bf16.mxu0 0
    %287 = vmatpush1.bf16.xpose.msra.mxu0 0
    %288 = vmatprep.subr.bf16.mxu0 0
    %289 = vmatpush1.bf16.xpose.msra.mxu0 0
    %290 = vmatprep.subr.bf16.mxu0 0
    %291 = vmatpush1.bf16.xpose.msra.mxu0 0
    %292 = vmatprep.mubr.bf16.mxu0 0
    %293 = vmatmul.mubr.bf16.gmra.mrb[0].mxu0 %v255
    %v294 = vpop.f32.mrb[0].mxu0
    %v295 = vadd.f32 0.0, %v294
    %v296 = vpop.f32.mrb[0].mxu0
    %v297 = vpop.f32.mrb[0].mxu0
    %v298 = vadd.f32 0.0, %v297
    %v299 = vpop.f32.mrb[0].mxu0
    %300 = vdwg.mxu0
    %v301 = vmul.f32 %v295, 0.125
    %v302 = vmul.f32 %v298, 0.125
    %vm303 = vcmask 80896
    %v304 = vsel %vm303, %v301, -inf
    %vm305 = vcmask 74752
    %v306 = vsel %vm305, %v302, -inf
    %v307 = vmax.f32 %v304, %v306
    %v308 = vrot.slane %v307, 4
    %v309 = vmax.f32 %v307, %v308
    %v310 = vrot.slane %v309, 2
    %v311 = vmax.f32 %v309, %v310
    %v312 = vrot.slane %v311, 1
    %v313 = vmax.f32 %v311, %v312
    %v314 = vsub.f32 %v301, %v313
    %v315 = vsub.f32 %v302, %v313
    %v316 = vmul.f32 %v314, 1.442695
    %v317 = vpow.pop %v316
    %v318 = vmul.f32 %v315, 1.442695
    %v319 = vpow.pop %v318
    %v320 = vsel %vm303, %v317, 0.0
    %v321 = vsel %vm305, %v319, 0.0
    %v322 = vadd.f32 %v320, %v321
    %v323 = vrot.slane %v322, 4
    %v324 = vadd.f32 %v322, %v323
    %v325 = vrot.slane %v324, 2
    %v326 = vadd.f32 %v324, %v325
    %v327 = vrot.slane %v326, 1
    %v328 = vadd.f32 %v326, %v327
    %v329 = vrcp.pop %v328
    %v330 = vmul.f32 %v317, %v329
    %v331 = vmul.f32 %v319, %v329
    %v332 = vadd.f32 %v330, 1e-08
    %v333 = vadd.f32 %v331, 1e-08
    %v334 = vsel %vm303, %v332, 0.0
    %335 = vadd.xlane.f32.xlu0 %v334
    %v336 = vpop.xlane.xlu0 %335
    %v337 = vsel %vm305, %v333, 0.0
    %338 = vadd.xlane.f32.xlu0 %v337
    %v339 = vpop.xlane.xlu0 %338
    %v340 = vrcp.pop %v336
    %v341 = vmul.f32 %v332, %v340
    %v342 = vrcp.pop %v339
    %v343 = vmul.f32 %v333, %v342
    %v344 = vpack.c.bf16 %v343, %v341
    %346 = vrot.lane.b32.xlu0 %v142, 64
    %v347 = vpop.permute.xlu0 %346
    %v349 = vsel %vm303, %v344, 0
    %vm351 = vcmask 1044480
    %v353 = vsel %vm351, %v347, 0
    %355 = vmatprep.subr.bf16.mxu0 0
    %356 = vmatpush1.bf16.msra.mxu0 %v353
    %357 = vmatprep.subr.bf16.mxu0 0
    %358 = vmatpush1.bf16.msra.mxu0 0
    %359 = vmatprep.subr.bf16.mxu0 0
    %360 = vmatpush1.bf16.msra.mxu0 0
    %361 = vmatprep.subr.bf16.mxu0 0
    %362 = vmatpush1.bf16.msra.mxu0 0
    %363 = vmatprep.subr.bf16.mxu0 0
    %364 = vmatpush1.bf16.msra.mxu0 0
    %365 = vmatprep.subr.bf16.mxu0 0
    %366 = vmatpush1.bf16.msra.mxu0 0
    %367 = vmatprep.subr.bf16.mxu0 0
    %368 = vmatpush1.bf16.msra.mxu0 0
    %369 = vmatprep.subr.bf16.mxu0 0
    %370 = vmatpush1.bf16.msra.mxu0 0
    %371 = vmatprep.subr.bf16.mxu0 0
    %372 = vmatpush1.bf16.msra.mxu0 0
    %373 = vmatprep.subr.bf16.mxu0 0
    %374 = vmatpush1.bf16.msra.mxu0 0
    %375 = vmatprep.subr.bf16.mxu0 0
    %376 = vmatpush1.bf16.msra.mxu0 0
    %377 = vmatprep.subr.bf16.mxu0 0
    %378 = vmatpush1.bf16.msra.mxu0 0
    %379 = vmatprep.subr.bf16.mxu0 0
    %380 = vmatpush1.bf16.msra.mxu0 0
    %381 = vmatprep.subr.bf16.mxu0 0
    %382 = vmatpush1.bf16.msra.mxu0 0
    %383 = vmatprep.subr.bf16.mxu0 0
    %384 = vmatpush1.bf16.msra.mxu0 0
    %385 = vmatprep.subr.bf16.mxu0 0
    %386 = vmatpush1.bf16.msra.mxu0 0
    %387 = vmatprep.mubr.bf16.mxu0 0
    %388 = vmatmul.mubr.bf16.gmra.mrb[0].mxu0 %v349
    %v389 = vpop.f32.mrb[0].mxu0
    %v390 = vadd.f32 0.0, %v389
    %v391 = vpop.f32.mrb[0].mxu0
    %v392 = vpop.f32.mrb[0].mxu0
    %v393 = vadd.f32 0.0, %v392
    %v394 = vpop.f32.mrb[0].mxu0
    %395 = vdwg.mxu0
    %398 = vrot.lane.b32.xlu0 %v57, 64
    %v399 = vpop.permute.xlu0 %398
    %400 = vrot.lane.b32.xlu0 %v58, 64
    %v401 = vpop.permute.xlu0 %400
    %v404 = vsel %vm97, %v390, %v399
    %v405 = vsel %vm97, %v393, %v401
    %v406 = vld [vmem:[#allocation5 + $0x100] sm:$0xff]
    %v407 = vld [vmem:[#allocation5 + $0x108] sm:$0xff]
    %v408 = vld [vmem:[#allocation5 + $0x110] sm:$0xff]
    %v409 = vld [vmem:[#allocation5 + $0x118] sm:$0xff]
    %v410 = vld [vmem:[#allocation5 + $0x120] sm:$0xff]
    %v411 = vld [vmem:[#allocation5 + $0x128] sm:$0xff]
    %v412 = vld [vmem:[#allocation5 + $0x130] sm:$0xff]
    %v413 = vld [vmem:[#allocation5 + $0x138] sm:$0xff]
    %v414 = vld [vmem:[#allocation5 + $0x140] sm:$0xff]
    %v415 = vld [vmem:[#allocation5 + $0x148] sm:$0xff]
    %v416 = vld [vmem:[#allocation5 + $0x150] sm:$0xff]
    %v417 = vld [vmem:[#allocation5 + $0x158] sm:$0xff]
    %v418 = vld [vmem:[#allocation5 + $0x160] sm:$0xff]
    %v419 = vld [vmem:[#allocation5 + $0x168] sm:$0xff]
    %v420 = vld [vmem:[#allocation5 + $0x170] sm:$0xff]
    %v421 = vld [vmem:[#allocation5 + $0x178] sm:$0xff]
    %v422 = vld [vmem:[#allocation5 + $0x180] sm:$0xff]
    %v423 = vld [vmem:[#allocation5 + $0x188] sm:$0xff]
    %v424 = vld [vmem:[#allocation5 + $0x190] sm:$0xff]
    %v425 = vld [vmem:[#allocation5 + $0x198] sm:$0xff]
    %v426 = vld [vmem:[#allocation5 + $0x1a0] sm:$0xff]
    %v427 = vld [vmem:[#allocation5 + $0x1a8] sm:$0xff]
    %v428 = vld [vmem:[#allocation5 + $0x1b0] sm:$0xff]
    %v429 = vld [vmem:[#allocation5 + $0x1b8] sm:$0xff]
    %v430 = vld [vmem:[#allocation5 + $0x1c0] sm:$0xff]
    %v431 = vld [vmem:[#allocation5 + $0x1c8] sm:$0xff]
    %v432 = vld [vmem:[#allocation5 + $0x1d0] sm:$0xff]
    %v433 = vld [vmem:[#allocation5 + $0x1d8] sm:$0xff]
    %v434 = vld [vmem:[#allocation5 + $0x1e0] sm:$0xff]
    %v435 = vld [vmem:[#allocation5 + $0x1e8] sm:$0xff]
    %v436 = vld [vmem:[#allocation5 + $0x1f0] sm:$0xff]
    %v437 = vld [vmem:[#allocation5 + $0x1f8] sm:$0xff]
    %v438 = vpack.c.bf16 %v405, %v404
    %s439 = scalar_lea.vmem [#allocation7], 2
    %v440 = vld [vmem:[%s439] ss:$8 sm:$0xf]
    %v442 = vlaneseq
    %v443 = vshrl.u32 %v442, 7
    %v444 = vsub.s32 0, %v443
    %v445 = vrot.slane %v440, %v444
    %v446 = vlaneseq
    %v447 = vshrl.u32 %v446, 7
    %v448 = vsub.s32 1, %v447
    %v449 = vrot.slane %v440, %v448
    %v450 = vlaneseq
    %v451 = vshrl.u32 %v450, 7
    %v452 = vsub.s32 2, %v451
    %v453 = vrot.slane %v440, %v452
    %v454 = vlaneseq
    %v455 = vshrl.u32 %v454, 7
    %v456 = vsub.s32 3, %v455
    %v457 = vrot.slane %v440, %v456
    %v494 = vunpack.c.l.b16 %v406
    %v495 = vunpack.c.h.b16 %v406
    %v496 = vunpack.c.l.b16 %v407
    %v497 = vunpack.c.h.b16 %v407
    %v498 = vunpack.c.l.b16 %v408
    %v499 = vunpack.c.h.b16 %v408
    %v500 = vunpack.c.l.b16 %v409
    %v501 = vunpack.c.h.b16 %v409
    %v502 = vunpack.c.l.b16 %v410
    %v503 = vunpack.c.h.b16 %v410
    %v504 = vunpack.c.l.b16 %v411
    %v505 = vunpack.c.h.b16 %v411
    %v506 = vunpack.c.l.b16 %v412
    %v507 = vunpack.c.h.b16 %v412
    %v508 = vunpack.c.l.b16 %v413
    %v509 = vunpack.c.h.b16 %v413
    %v510 = vunpack.c.l.b16 %v414
    %v511 = vunpack.c.h.b16 %v414
    %v512 = vunpack.c.l.b16 %v415
    %v513 = vunpack.c.h.b16 %v415
    %v514 = vunpack.c.l.b16 %v416
    %v515 = vunpack.c.h.b16 %v416
    %v516 = vunpack.c.l.b16 %v417
    %v517 = vunpack.c.h.b16 %v417
    %v518 = vunpack.c.l.b16 %v418
    %v519 = vunpack.c.h.b16 %v418
    %v520 = vunpack.c.l.b16 %v419
    %v521 = vunpack.c.h.b16 %v419
    %v522 = vunpack.c.l.b16 %v420
    %v523 = vunpack.c.h.b16 %v420
    %v524 = vunpack.c.l.b16 %v421
    %v525 = vunpack.c.h.b16 %v421
    %v526 = vunpack.c.l.b16 %v422
    %v527 = vunpack.c.h.b16 %v422
    %v528 = vunpack.c.l.b16 %v423
    %v529 = vunpack.c.h.b16 %v423
    %v530 = vunpack.c.l.b16 %v424
    %v531 = vunpack.c.h.b16 %v424
    %v532 = vunpack.c.l.b16 %v425
    %v533 = vunpack.c.h.b16 %v425
    %v534 = vunpack.c.l.b16 %v426
    %v535 = vunpack.c.h.b16 %v426
    %v536 = vunpack.c.l.b16 %v427
    %v537 = vunpack.c.h.b16 %v427
    %v538 = vunpack.c.l.b16 %v428
    %v539 = vunpack.c.h.b16 %v428
    %v540 = vunpack.c.l.b16 %v429
    %v541 = vunpack.c.h.b16 %v429
    %v542 = vunpack.c.l.b16 %v430
    %v543 = vunpack.c.h.b16 %v430
    %v544 = vunpack.c.l.b16 %v431
    %v545 = vunpack.c.h.b16 %v431
    %v546 = vunpack.c.l.b16 %v432
    %v547 = vunpack.c.h.b16 %v432
    %v548 = vunpack.c.l.b16 %v433
    %v549 = vunpack.c.h.b16 %v433
    %v550 = vunpack.c.l.b16 %v434
    %v551 = vunpack.c.h.b16 %v434
    %v552 = vunpack.c.l.b16 %v435
    %v553 = vunpack.c.h.b16 %v435
    %v554 = vunpack.c.l.b16 %v436
    %v555 = vunpack.c.h.b16 %v436
    %v556 = vunpack.c.l.b16 %v437
    %v557 = vunpack.c.h.b16 %v437
    %v558 = vpack.c.b16 %v498, %v494
    %v559 = vpack.c.b16 %v499, %v495
    %v560 = vpack.c.b16 %v500, %v496
    %v561 = vpack.c.b16 %v501, %v497
    %v562 = vpack.c.b16 %v506, %v502
    %v563 = vpack.c.b16 %v507, %v503
    %v564 = vpack.c.b16 %v508, %v504
    %v565 = vpack.c.b16 %v509, %v505
    %v566 = vpack.c.b16 %v514, %v510
    %v567 = vpack.c.b16 %v515, %v511
    %v568 = vpack.c.b16 %v516, %v512
    %v569 = vpack.c.b16 %v517, %v513
    %v570 = vpack.c.b16 %v522, %v518
    %v571 = vpack.c.b16 %v523, %v519
    %v572 = vpack.c.b16 %v524, %v520
    %v573 = vpack.c.b16 %v525, %v521
    %v574 = vpack.c.b16 %v530, %v526
    %v575 = vpack.c.b16 %v531, %v527
    %v576 = vpack.c.b16 %v532, %v528
    %v577 = vpack.c.b16 %v533, %v529
    %v578 = vpack.c.b16 %v538, %v534
    %v579 = vpack.c.b16 %v539, %v535
    %v580 = vpack.c.b16 %v540, %v536
    %v581 = vpack.c.b16 %v541, %v537
    %v582 = vpack.c.b16 %v546, %v542
    %v583 = vpack.c.b16 %v547, %v543
    %v584 = vpack.c.b16 %v548, %v544
    %v585 = vpack.c.b16 %v549, %v545
    %v586 = vpack.c.b16 %v554, %v550
    %v587 = vpack.c.b16 %v555, %v551
    %v588 = vpack.c.b16 %v556, %v552
    %v589 = vpack.c.b16 %v557, %v553
    %622 = vmatprep.subr.bf16.mxu0 %v559
    %623 = vmatpush1.bf16.msra.mxu0 %v558
    %624 = vmatprep.subr.bf16.mxu0 %v563
    %625 = vmatpush1.bf16.msra.mxu0 %v562
    %626 = vmatprep.subr.bf16.mxu0 %v567
    %627 = vmatpush1.bf16.msra.mxu0 %v566
    %628 = vmatprep.subr.bf16.mxu0 %v571
    %629 = vmatpush1.bf16.msra.mxu0 %v570
    %630 = vmatprep.subr.bf16.mxu0 %v575
    %631 = vmatpush1.bf16.msra.mxu0 %v574
    %632 = vmatprep.subr.bf16.mxu0 %v579
    %633 = vmatpush1.bf16.msra.mxu0 %v578
    %634 = vmatprep.subr.bf16.mxu0 %v583
    %635 = vmatpush1.bf16.msra.mxu0 %v582
    %636 = vmatprep.subr.bf16.mxu0 %v587
    %637 = vmatpush1.bf16.msra.mxu0 %v586
    %638 = vmatprep.subr.bf16.mxu0 0
    %639 = vmatpush1.bf16.msra.mxu0 0
    %640 = vmatprep.subr.bf16.mxu0 0
    %641 = vmatpush1.bf16.msra.mxu0 0
    %642 = vmatprep.subr.bf16.mxu0 0
    %643 = vmatpush1.bf16.msra.mxu0 0
    %644 = vmatprep.subr.bf16.mxu0 0
    %645 = vmatpush1.bf16.msra.mxu0 0
    %646 = vmatprep.subr.bf16.mxu0 0
    %647 = vmatpush1.bf16.msra.mxu0 0
    %648 = vmatprep.subr.bf16.mxu0 0
    %649 = vmatpush1.bf16.msra.mxu0 0
    %650 = vmatprep.subr.bf16.mxu0 0
    %651 = vmatpush1.bf16.msra.mxu0 0
    %652 = vmatprep.subr.bf16.mxu0 0
    %653 = vmatpush1.bf16.msra.mxu0 0
    %654 = vmatprep.mubr.bf16.mxu0 0
    %655 = vmatmul.mubr.bf16.gmra.mrb[0].mxu0 %v438
    %v656 = vpop.f32.mrb[0].mxu0
    %v657 = vadd.f32 %v445, %v656
    %v658 = vpop.f32.mrb[0].mxu0
    %v659 = vadd.f32 %v449, %v658
    %v660 = vpop.f32.mrb[0].mxu0
    %v661 = vadd.f32 %v445, %v660
    %v662 = vpop.f32.mrb[0].mxu0
    %v663 = vadd.f32 %v449, %v662
    %664 = vdwg.mxu0
    %665 = vmatprep.subr.bf16.mxu0 %v561
    %666 = vmatpush1.bf16.msra.mxu0 %v560
    %667 = vmatprep.subr.bf16.mxu0 %v565
    %668 = vmatpush1.bf16.msra.mxu0 %v564
    %669 = vmatprep.subr.bf16.mxu0 %v569
    %670 = vmatpush1.bf16.msra.mxu0 %v568
    %671 = vmatprep.subr.bf16.mxu0 %v573
    %672 = vmatpush1.bf16.msra.mxu0 %v572
    %673 = vmatprep.subr.bf16.mxu0 %v577
    %674 = vmatpush1.bf16.msra.mxu0 %v576
    %675 = vmatprep.subr.bf16.mxu0 %v581
    %676 = vmatpush1.bf16.msra.mxu0 %v580
    %677 = vmatprep.subr.bf16.mxu0 %v585
    %678 = vmatpush1.bf16.msra.mxu0 %v584
    %679 = vmatprep.subr.bf16.mxu0 %v589
    %680 = vmatpush1.bf16.msra.mxu0 %v588
    %681 = vmatprep.subr.bf16.mxu0 0
    %682 = vmatpush1.bf16.msra.mxu0 0
    %683 = vmatprep.subr.bf16.mxu0 0
    %684 = vmatpush1.bf16.msra.mxu0 0
    %685 = vmatprep.subr.bf16.mxu0 0
    %686 = vmatpush1.bf16.msra.mxu0 0
    %687 = vmatprep.subr.bf16.mxu0 0
    %688 = vmatpush1.bf16.msra.mxu0 0
    %689 = vmatprep.subr.bf16.mxu0 0
    %690 = vmatpush1.bf16.msra.mxu0 0
    %691 = vmatprep.subr.bf16.mxu0 0
    %692 = vmatpush1.bf16.msra.mxu0 0
    %693 = vmatprep.subr.bf16.mxu0 0
    %694 = vmatpush1.bf16.msra.mxu0 0
    %695 = vmatprep.subr.bf16.mxu0 0
    %696 = vmatpush1.bf16.msra.mxu0 0
    %697 = vmatprep.mubr.bf16.mxu0 0
    %698 = vmatmul.mubr.bf16.gmra.mrb[0].mxu0 %v438
    %v699 = vpop.f32.mrb[0].mxu0
    %v700 = vadd.f32 %v453, %v699
    %v701 = vpop.f32.mrb[0].mxu0
    %v702 = vadd.f32 %v457, %v701
    %v703 = vpop.f32.mrb[0].mxu0
    %v704 = vadd.f32 %v453, %v703
    %v705 = vpop.f32.mrb[0].mxu0
    %v706 = vadd.f32 %v457, %v705
    %707 = vdwg.mxu0
    %v708 = vxor.u32 %v657, 2147483648
    %v709 = vxor.u32 %v661, 2147483648
    %v710 = vmul.f32 %v708, 1.442695
    %v711 = vpow.pop %v710
    %v712 = vmul.f32 %v709, 1.442695
    %v713 = vpow.pop %v712
    %v714 = vadd.f32 %v711, 1.0
    %v715 = vadd.f32 %v713, 1.0
    %v716 = vrcp.pop %v714
    %v717 = vmul.f32 1.0, %v716
    %v718 = vrcp.pop %v715
    %v719 = vmul.f32 1.0, %v718
    %v720 = vxor.u32 %v659, 2147483648
    %v721 = vxor.u32 %v663, 2147483648
    %v722 = vmul.f32 %v720, 1.442695
    %v723 = vpow.pop %v722
    %v724 = vmul.f32 %v721, 1.442695
    %v725 = vpow.pop %v724
    %v726 = vadd.f32 %v723, 1.0
    %v727 = vadd.f32 %v725, 1.0
    %v728 = vrcp.pop %v726
    %v729 = vmul.f32 1.0, %v728
    %v730 = vrcp.pop %v727
    %v731 = vmul.f32 1.0, %v730
    %v732 = vmul.f32 %v717, %v702
    %v733 = vmul.f32 %v719, %v706
    %v734 = vadd.f32 %v700, %v732
    %v735 = vadd.f32 %v704, %v733
    %v736 = vtanh.pop %v734
    %v737 = vtanh.pop %v735
    %v738 = vsub.f32 1.0, %v729
    %v739 = vsub.f32 1.0, %v731
    %v740 = vmul.f32 %v738, %v736
    %v741 = vmul.f32 %v739, %v737
    %v742 = vmul.f32 %v729, %v57
    %v743 = vmul.f32 %v731, %v58
    %v744 = vadd.f32 %v740, %v742
    %v745 = vadd.f32 %v741, %v743
    %v746 = vsel %vm97, %v744, 0.0
    %747 = vadd.xlane.f32.xlu0 %v746
    %v748 = vpop.xlane.xlu0 %747
    %v749 = vsel %vm146, %v745, 0.0
    %750 = vadd.xlane.f32.xlu0 %v749
    %v751 = vpop.xlane.xlu0 %750
    %v752 = vmul.f32 %v748, %v150
    %v753 = vmul.f32 %v751, %v150
    %v754 = vsub.f32 %v744, %v752
    %v755 = vsub.f32 %v745, %v753
    %v756 = vmul.f32 %v754, %v754
    %v757 = vmul.f32 %v755, %v755
    %v758 = vsel %vm97, %v756, 0.0
    %759 = vadd.xlane.f32.xlu0 %v758
    %v760 = vpop.xlane.xlu0 %759
    %v761 = vsel %vm146, %v757, 0.0
    %762 = vadd.xlane.f32.xlu0 %v761
    %v763 = vpop.xlane.xlu0 %762
    %v764 = vmul.f32 %v760, %v150
    %v765 = vmul.f32 %v763, %v150
    %v766 = vadd.f32 %v764, 1e-05
    %v767 = vadd.f32 %v765, 1e-05
    %v768 = vrsqrt.pop %v766
    %v769 = vrsqrt.pop %v767
    %v770 = vmul.f32 %v754, %v768
    %v771 = vmul.f32 %v755, %v769
    %v772 = vmul.f32 %v770, %v61
    %v773 = vmul.f32 %v771, %v61
    %v774 = vadd.f32 %v772, %v62
    %v775 = vadd.f32 %v773, %v62
    %v776 = vld [vmem:[#allocation5 + $0x200] sm:$0xf]
    %v777 = vld [vmem:[#allocation5 + $0x210] sm:$0xf]
    %v778 = vld [vmem:[#allocation5 + $0x220] sm:$0xf]
    %v779 = vld [vmem:[#allocation5 + $0x230] sm:$0xf]
    %v780 = vld [vmem:[#allocation5 + $0x240] sm:$0xf]
    %v781 = vld [vmem:[#allocation5 + $0x250] sm:$0xf]
    %v782 = vld [vmem:[#allocation5 + $0x260] sm:$0xf]
    %v783 = vld [vmem:[#allocation5 + $0x270] sm:$0xf]
    %v784 = vpack.c.bf16 %v775, %v774
    %v785 = vld [vmem:[#allocation7 + $0x3] ss:$0 sm:$0xff]
    %v794 = vunpack.c.l.b16 %v776
    %v795 = vunpack.c.l.b16 %v777
    %v796 = vunpack.c.l.b16 %v778
    %v797 = vunpack.c.l.b16 %v779
    %v798 = vunpack.c.l.b16 %v780
    %v799 = vunpack.c.l.b16 %v781
    %v800 = vunpack.c.l.b16 %v782
    %v801 = vunpack.c.l.b16 %v783
    %v802 = vpack.c.b16 %v795, %v794
    %v803 = vpack.c.b16 %v797, %v796
    %v804 = vpack.c.b16 %v799, %v798
    %v805 = vpack.c.b16 %v801, %v800
    %v811 = vsel %vm97, %v784, 0
    %813 = vmatprep.subr.bf16.mxu0 0
    %814 = vmatpush1.bf16.msra.mxu0 %v802
    %815 = vmatprep.subr.bf16.mxu0 0
    %816 = vmatpush1.bf16.msra.mxu0 %v803
    %817 = vmatprep.subr.bf16.mxu0 0
    %818 = vmatpush1.bf16.msra.mxu0 %v804
    %819 = vmatprep.subr.bf16.mxu0 0
    %820 = vmatpush1.bf16.msra.mxu0 %v805
    %821 = vmatprep.subr.bf16.mxu0 0
    %822 = vmatpush1.bf16.msra.mxu0 0
    %823 = vmatprep.subr.bf16.mxu0 0
    %824 = vmatpush1.bf16.msra.mxu0 0
    %825 = vmatprep.subr.bf16.mxu0 0
    %826 = vmatpush1.bf16.msra.mxu0 0
    %827 = vmatprep.subr.bf16.mxu0 0
    %828 = vmatpush1.bf16.msra.mxu0 0
    %829 = vmatprep.subr.bf16.mxu0 0
    %830 = vmatpush1.bf16.msra.mxu0 0
    %831 = vmatprep.subr.bf16.mxu0 0
    %832 = vmatpush1.bf16.msra.mxu0 0
    %833 = vmatprep.subr.bf16.mxu0 0
    %834 = vmatpush1.bf16.msra.mxu0 0
    %835 = vmatprep.subr.bf16.mxu0 0
    %836 = vmatpush1.bf16.msra.mxu0 0
    %837 = vmatprep.subr.bf16.mxu0 0
    %838 = vmatpush1.bf16.msra.mxu0 0
    %839 = vmatprep.subr.bf16.mxu0 0
    %840 = vmatpush1.bf16.msra.mxu0 0
    %841 = vmatprep.subr.bf16.mxu0 0
    %842 = vmatpush1.bf16.msra.mxu0 0
    %843 = vmatprep.subr.bf16.mxu0 0
    %844 = vmatpush1.bf16.msra.mxu0 0
    %845 = vmatprep.mubr.bf16.mxu0 0
    %846 = vmatmul.mubr.bf16.gmra.mrb[0].mxu0 %v811
    %v847 = vpop.f32.mrb[0].mxu0
    %v848 = vadd.f32 %v785, %v847
    %v849 = vpop.f32.mrb[0].mxu0
    %v850 = vpop.f32.mrb[0].mxu0
    %v851 = vadd.f32 %v785, %v850
    %v852 = vpop.f32.mrb[0].mxu0
    %853 = vdwg.mxu0
    %v854 = vmax.f32 %v848, 0.0
    %v855 = vmax.f32 %v851, 0.0
    %v856 = vld [vmem:[#allocation5 + $0x280] sm:$0xf]
    %v857 = vld [vmem:[#allocation5 + $0x290] sm:$0xf]
    %v858 = vld [vmem:[#allocation5 + $0x2a0] sm:$0xf]
    %v859 = vld [vmem:[#allocation5 + $0x2b0] sm:$0xf]
    %v860 = vld [vmem:[#allocation5 + $0x2c0] sm:$0xf]
    %v861 = vld [vmem:[#allocation5 + $0x2d0] sm:$0xf]
    %v862 = vld [vmem:[#allocation5 + $0x2e0] sm:$0xf]
    %v863 = vld [vmem:[#allocation5 + $0x2f0] sm:$0xf]
    %v864 = vld [vmem:[#allocation5 + $0x300] sm:$0xf]
    %v865 = vld [vmem:[#allocation5 + $0x310] sm:$0xf]
    %v866 = vld [vmem:[#allocation5 + $0x320] sm:$0xf]
    %v867 = vld [vmem:[#allocation5 + $0x330] sm:$0xf]
    %v868 = vld [vmem:[#allocation5 + $0x340] sm:$0xf]
    %v869 = vld [vmem:[#allocation5 + $0x350] sm:$0xf]
    %v870 = vld [vmem:[#allocation5 + $0x360] sm:$0xf]
    %v871 = vld [vmem:[#allocation5 + $0x370] sm:$0xf]
    %v872 = vpack.c.bf16 %v855, %v854
    %v889 = vunpack.c.l.b16 %v856
    %v890 = vunpack.c.l.b16 %v857
    %v891 = vunpack.c.l.b16 %v858
    %v892 = vunpack.c.l.b16 %v859
    %v893 = vunpack.c.l.b16 %v860
    %v894 = vunpack.c.l.b16 %v861
    %v895 = vunpack.c.l.b16 %v862
    %v896 = vunpack.c.l.b16 %v863
    %v897 = vunpack.c.l.b16 %v864
    %v898 = vunpack.c.l.b16 %v865
    %v899 = vunpack.c.l.b16 %v866
    %v900 = vunpack.c.l.b16 %v867
    %v901 = vunpack.c.l.b16 %v868
    %v902 = vunpack.c.l.b16 %v869
    %v903 = vunpack.c.l.b16 %v870
    %v904 = vunpack.c.l.b16 %v871
    %v905 = vpack.c.b16 %v890, %v889
    %v906 = vpack.c.b16 %v892, %v891
    %v907 = vpack.c.b16 %v894, %v893
    %v908 = vpack.c.b16 %v896, %v895
    %v909 = vpack.c.b16 %v898, %v897
    %v910 = vpack.c.b16 %v900, %v899
    %v911 = vpack.c.b16 %v902, %v901
    %v912 = vpack.c.b16 %v904, %v903
    %921 = vmatprep.subr.bf16.mxu0 0
    %922 = vmatpush1.bf16.msra.mxu0 %v905
    %923 = vmatprep.subr.bf16.mxu0 0
    %924 = vmatpush1.bf16.msra.mxu0 %v906
    %925 = vmatprep.subr.bf16.mxu0 0
    %926 = vmatpush1.bf16.msra.mxu0 %v907
    %927 = vmatprep.subr.bf16.mxu0 0
    %928 = vmatpush1.bf16.msra.mxu0 %v908
    %929 = vmatprep.subr.bf16.mxu0 0
    %930 = vmatpush1.bf16.msra.mxu0 %v909
    %931 = vmatprep.subr.bf16.mxu0 0
    %932 = vmatpush1.bf16.msra.mxu0 %v910
    %933 = vmatprep.subr.bf16.mxu0 0
    %934 = vmatpush1.bf16.msra.mxu0 %v911
    %935 = vmatprep.subr.bf16.mxu0 0
    %936 = vmatpush1.bf16.msra.mxu0 %v912
    %937 = vmatprep.subr.bf16.mxu0 0
    %938 = vmatpush1.bf16.msra.mxu0 0
    %939 = vmatprep.subr.bf16.mxu0 0
    %940 = vmatpush1.bf16.msra.mxu0 0
    %941 = vmatprep.subr.bf16.mxu0 0
    %942 = vmatpush1.bf16.msra.mxu0 0
    %943 = vmatprep.subr.bf16.mxu0 0
    %944 = vmatpush1.bf16.msra.mxu0 0
    %945 = vmatprep.subr.bf16.mxu0 0
    %946 = vmatpush1.bf16.msra.mxu0 0
    %947 = vmatprep.subr.bf16.mxu0 0
    %948 = vmatpush1.bf16.msra.mxu0 0
    %949 = vmatprep.subr.bf16.mxu0 0
    %950 = vmatpush1.bf16.msra.mxu0 0
    %951 = vmatprep.subr.bf16.mxu0 0
    %952 = vmatpush1.bf16.msra.mxu0 0
    %953 = vmatprep.mubr.bf16.mxu0 0
    %954 = vmatmul.mubr.bf16.gmra.mrb[0].mxu0 %v872
    %v955 = vpop.f32.mrb[0].mxu0
    %v956 = vadd.f32 0.0, %v955
    %v957 = vpop.f32.mrb[0].mxu0
    %v958 = vpop.f32.mrb[0].mxu0
    %v959 = vadd.f32 0.0, %v958
    %v960 = vpop.f32.mrb[0].mxu0
    %961 = vdwg.mxu0
    %v962 = vadd.f32 %v744, %v956
    %v963 = vadd.f32 %v745, %v959
    %v964 = vld [vmem:[#allocation7 + $0x4] ss:$0 sm:$0xff]
    %v965 = vadd.f32 %v962, %v964
    %v966 = vadd.f32 %v963, %v964
    %v967 = vsel %vm97, %v965, 0.0
    %968 = vadd.xlane.f32.xlu0 %v967
    %v969 = vpop.xlane.xlu0 %968
    %v970 = vsel %vm146, %v966, 0.0
    %971 = vadd.xlane.f32.xlu0 %v970
    %v972 = vpop.xlane.xlu0 %971
    %v973 = vmul.f32 %v969, %v150
    %v974 = vmul.f32 %v972, %v150
    %v975 = vsub.f32 %v965, %v973
    %v976 = vsub.f32 %v966, %v974
    %v977 = vmul.f32 %v975, %v975
    %v978 = vmul.f32 %v976, %v976
    %v979 = vsel %vm97, %v977, 0.0
    %980 = vadd.xlane.f32.xlu0 %v979
    %v981 = vpop.xlane.xlu0 %980
    %v982 = vsel %vm146, %v978, 0.0
    %983 = vadd.xlane.f32.xlu0 %v982
    %v984 = vpop.xlane.xlu0 %983
    %v985 = vmul.f32 %v981, %v150
    %v986 = vmul.f32 %v984, %v150
    %v987 = vadd.f32 %v985, 1e-05
    %v988 = vadd.f32 %v986, 1e-05
    %v989 = vrsqrt.pop %v987
    %v990 = vrsqrt.pop %v988
    %v991 = vmul.f32 %v975, %v989
    %v992 = vmul.f32 %v976, %v990
    %v993 = vmul.f32 %v991, %v59
    %v994 = vmul.f32 %v992, %v59
    %v995 = vadd.f32 %v993, %v60
    %v996 = vadd.f32 %v994, %v60
    %v997 = vpack.c.bf16 %v996, %v995
    %v999 = vsel %vm97, %v997, 0
    %1001 = vmatprep.subr.bf16.mxu0 0
    %1002 = vmatpush1.bf16.msra.mxu0 %v201
    %1003 = vmatprep.subr.bf16.mxu0 0
    %1004 = vmatpush1.bf16.msra.mxu0 %v202
    %1005 = vmatprep.subr.bf16.mxu0 0
    %1006 = vmatpush1.bf16.msra.mxu0 %v203
    %1007 = vmatprep.subr.bf16.mxu0 0
    %1008 = vmatpush1.bf16.msra.mxu0 %v204
    %1009 = vmatprep.subr.bf16.mxu0 0
    %1010 = vmatpush1.bf16.msra.mxu0 0
    %1011 = vmatprep.subr.bf16.mxu0 0
    %1012 = vmatpush1.bf16.msra.mxu0 0
    %1013 = vmatprep.subr.bf16.mxu0 0
    %1014 = vmatpush1.bf16.msra.mxu0 0
    %1015 = vmatprep.subr.bf16.mxu0 0
    %1016 = vmatpush1.bf16.msra.mxu0 0
    %1017 = vmatprep.subr.bf16.mxu0 0
    %1018 = vmatpush1.bf16.msra.mxu0 0
    %1019 = vmatprep.subr.bf16.mxu0 0
    %1020 = vmatpush1.bf16.msra.mxu0 0
    %1021 = vmatprep.subr.bf16.mxu0 0
    %1022 = vmatpush1.bf16.msra.mxu0 0
    %1023 = vmatprep.subr.bf16.mxu0 0
    %1024 = vmatpush1.bf16.msra.mxu0 0
    %1025 = vmatprep.subr.bf16.mxu0 0
    %1026 = vmatpush1.bf16.msra.mxu0 0
    %1027 = vmatprep.subr.bf16.mxu0 0
    %1028 = vmatpush1.bf16.msra.mxu0 0
    %1029 = vmatprep.subr.bf16.mxu0 0
    %1030 = vmatpush1.bf16.msra.mxu0 0
    %1031 = vmatprep.subr.bf16.mxu0 0
    %1032 = vmatpush1.bf16.msra.mxu0 0
    %1033 = vmatprep.mubr.bf16.mxu0 0
    %1034 = vmatmul.mubr.bf16.gmra.mrb[0].mxu0 %v999
    %v1035 = vpop.f32.mrb[0].mxu0
    %v1036 = vadd.f32 %v184, %v1035
    %v1037 = vpop.f32.mrb[0].mxu0
    %v1038 = vpop.f32.mrb[0].mxu0
    %v1039 = vadd.f32 %v184, %v1038
    %v1040 = vpop.f32.mrb[0].mxu0
    %1041 = vdwg.mxu0
    %v1042 = vpack.c.bf16 %v1039, %v1036
    %v1044 = vsel %vm97, %v1042, 0
    %1046 = vmatprep.subr.bf16.mxu0 0
    %1047 = vmatpush1.bf16.xpose.msra.mxu0 %v1044
    %1048 = vmatprep.subr.bf16.mxu0 0
    %1049 = vmatpush1.bf16.xpose.msra.mxu0 0
    %1050 = vmatprep.subr.bf16.mxu0 0
    %1051 = vmatpush1.bf16.xpose.msra.mxu0 0
    %1052 = vmatprep.subr.bf16.mxu0 0
    %1053 = vmatpush1.bf16.xpose.msra.mxu0 0
    %1054 = vmatprep.subr.bf16.mxu0 0
    %1055 = vmatpush1.bf16.xpose.msra.mxu0 0
    %1056 = vmatprep.subr.bf16.mxu0 0
    %1057 = vmatpush1.bf16.xpose.msra.mxu0 0
    %1058 = vmatprep.subr.bf16.mxu0 0
    %1059 = vmatpush1.bf16.xpose.msra.mxu0 0
    %1060 = vmatprep.subr.bf16.mxu0 0
    %1061 = vmatpush1.bf16.xpose.msra.mxu0 0
    %1062 = vmatprep.subr.bf16.mxu0 0
    %1063 = vmatpush1.bf16.xpose.msra.mxu0 0
    %1064 = vmatprep.subr.bf16.mxu0 0
    %1065 = vmatpush1.bf16.xpose.msra.mxu0 0
    %1066 = vmatprep.subr.bf16.mxu0 0
    %1067 = vmatpush1.bf16.xpose.msra.mxu0 0
    %1068 = vmatprep.subr.bf16.mxu0 0
    %1069 = vmatpush1.bf16.xpose.msra.mxu0 0
    %1070 = vmatprep.subr.bf16.mxu0 0
    %1071 = vmatpush1.bf16.xpose.msra.mxu0 0
    %1072 = vmatprep.subr.bf16.mxu0 0
    %1073 = vmatpush1.bf16.xpose.msra.mxu0 0
    %1074 = vmatprep.subr.bf16.mxu0 0
    %1075 = vmatpush1.bf16.xpose.msra.mxu0 0
    %1076 = vmatprep.subr.bf16.mxu0 0
    %1077 = vmatpush1.bf16.xpose.msra.mxu0 0
    %1078 = vmatprep.mubr.bf16.mxu0 0
    %1079 = vmatmul.mubr.bf16.gmra.mrb[0].mxu0 %v255
    %v1080 = vpop.f32.mrb[0].mxu0
    %v1081 = vadd.f32 0.0, %v1080
    %v1082 = vpop.f32.mrb[0].mxu0
    %v1083 = vpop.f32.mrb[0].mxu0
    %v1084 = vadd.f32 0.0, %v1083
    %v1085 = vpop.f32.mrb[0].mxu0
    %1086 = vdwg.mxu0
    %v1087 = vmul.f32 %v1081, 0.125
    %v1088 = vmul.f32 %v1084, 0.125
    %v1089 = vsel %vm303, %v1087, -inf
    %v1090 = vsel %vm305, %v1088, -inf
    %v1091 = vmax.f32 %v1089, %v1090
    %v1092 = vrot.slane %v1091, 4
    %v1093 = vmax.f32 %v1091, %v1092
    %v1094 = vrot.slane %v1093, 2
    %v1095 = vmax.f32 %v1093, %v1094
    %v1096 = vrot.slane %v1095, 1
    %v1097 = vmax.f32 %v1095, %v1096
    %v1098 = vsub.f32 %v1087, %v1097
    %v1099 = vsub.f32 %v1088, %v1097
    %v1100 = vmul.f32 %v1098, 1.442695
    %v1101 = vpow.pop %v1100
    %v1102 = vmul.f32 %v1099, 1.442695
    %v1103 = vpow.pop %v1102
    %v1104 = vsel %vm303, %v1101, 0.0
    %v1105 = vsel %vm305, %v1103, 0.0
    %v1106 = vadd.f32 %v1104, %v1105
    %v1107 = vrot.slane %v1106, 4
    %v1108 = vadd.f32 %v1106, %v1107
    %v1109 = vrot.slane %v1108, 2
    %v1110 = vadd.f32 %v1108, %v1109
    %v1111 = vrot.slane %v1110, 1
    %v1112 = vadd.f32 %v1110, %v1111
    %v1113 = vrcp.pop %v1112
    %v1114 = vmul.f32 %v1101, %v1113
    %v1115 = vmul.f32 %v1103, %v1113
    %v1116 = vadd.f32 %v1114, 1e-08
    %v1117 = vadd.f32 %v1115, 1e-08
    %v1118 = vsel %vm303, %v1116, 0.0
    %1119 = vadd.xlane.f32.xlu0 %v1118
    %v1120 = vpop.xlane.xlu0 %1119
    %v1121 = vsel %vm305, %v1117, 0.0
    %1122 = vadd.xlane.f32.xlu0 %v1121
    %v1123 = vpop.xlane.xlu0 %1122
    %v1124 = vrcp.pop %v1120
    %v1125 = vmul.f32 %v1116, %v1124
    %v1126 = vrcp.pop %v1123
    %v1127 = vmul.f32 %v1117, %v1126
    %v1128 = vpack.c.bf16 %v1127, %v1125
    %v1130 = vsel %vm303, %v1128, 0
    %1132 = vmatprep.subr.bf16.mxu0 0
    %1133 = vmatpush1.bf16.msra.mxu0 %v353
    %1134 = vmatprep.subr.bf16.mxu0 0
    %1135 = vmatpush1.bf16.msra.mxu0 0
    %1136 = vmatprep.subr.bf16.mxu0 0
    %1137 = vmatpush1.bf16.msra.mxu0 0
    %1138 = vmatprep.subr.bf16.mxu0 0
    %1139 = vmatpush1.bf16.msra.mxu0 0
    %1140 = vmatprep.subr.bf16.mxu0 0
    %1141 = vmatpush1.bf16.msra.mxu0 0
    %1142 = vmatprep.subr.bf16.mxu0 0
    %1143 = vmatpush1.bf16.msra.mxu0 0
    %1144 = vmatprep.subr.bf16.mxu0 0
    %1145 = vmatpush1.bf16.msra.mxu0 0
    %1146 = vmatprep.subr.bf16.mxu0 0
    %1147 = vmatpush1.bf16.msra.mxu0 0
    %1148 = vmatprep.subr.bf16.mxu0 0
    %1149 = vmatpush1.bf16.msra.mxu0 0
    %1150 = vmatprep.subr.bf16.mxu0 0
    %1151 = vmatpush1.bf16.msra.mxu0 0
    %1152 = vmatprep.subr.bf16.mxu0 0
    %1153 = vmatpush1.bf16.msra.mxu0 0
    %1154 = vmatprep.subr.bf16.mxu0 0
    %1155 = vmatpush1.bf16.msra.mxu0 0
    %1156 = vmatprep.subr.bf16.mxu0 0
    %1157 = vmatpush1.bf16.msra.mxu0 0
    %1158 = vmatprep.subr.bf16.mxu0 0
    %1159 = vmatpush1.bf16.msra.mxu0 0
    %1160 = vmatprep.subr.bf16.mxu0 0
    %1161 = vmatpush1.bf16.msra.mxu0 0
    %1162 = vmatprep.subr.bf16.mxu0 0
    %1163 = vmatpush1.bf16.msra.mxu0 0
    %1164 = vmatprep.mubr.bf16.mxu0 0
    %1165 = vmatmul.mubr.bf16.gmra.mrb[0].mxu0 %v1130
    %v1166 = vpop.f32.mrb[0].mxu0
    %v1167 = vadd.f32 0.0, %v1166
    %v1168 = vpop.f32.mrb[0].mxu0
    %v1169 = vpop.f32.mrb[0].mxu0
    %v1170 = vadd.f32 0.0, %v1169
    %v1171 = vpop.f32.mrb[0].mxu0
    %1172 = vdwg.mxu0
    %1175 = vrot.lane.b32.xlu0 %v965, 64
    %v1176 = vpop.permute.xlu0 %1175
    %1177 = vrot.lane.b32.xlu0 %v966, 64
    %v1178 = vpop.permute.xlu0 %1177
    %v1181 = vsel %vm97, %v1167, %v1176
    %v1182 = vsel %vm97, %v1170, %v1178
    %v1183 = vpack.c.bf16 %v1182, %v1181
    %1184 = vmatprep.subr.bf16.mxu0 %v559
    %1185 = vmatpush1.bf16.msra.mxu0 %v558
    %1186 = vmatprep.subr.bf16.mxu0 %v563
    %1187 = vmatpush1.bf16.msra.mxu0 %v562
    %1188 = vmatprep.subr.bf16.mxu0 %v567
    %1189 = vmatpush1.bf16.msra.mxu0 %v566
    %1190 = vmatprep.subr.bf16.mxu0 %v571
    %1191 = vmatpush1.bf16.msra.mxu0 %v570
    %1192 = vmatprep.subr.bf16.mxu0 %v575
    %1193 = vmatpush1.bf16.msra.mxu0 %v574
    %1194 = vmatprep.subr.bf16.mxu0 %v579
    %1195 = vmatpush1.bf16.msra.mxu0 %v578
    %1196 = vmatprep.subr.bf16.mxu0 %v583
    %1197 = vmatpush1.bf16.msra.mxu0 %v582
    %1198 = vmatprep.subr.bf16.mxu0 %v587
    %1199 = vmatpush1.bf16.msra.mxu0 %v586
    %1200 = vmatprep.subr.bf16.mxu0 0
    %1201 = vmatpush1.bf16.msra.mxu0 0
    %1202 = vmatprep.subr.bf16.mxu0 0
    %1203 = vmatpush1.bf16.msra.mxu0 0
    %1204 = vmatprep.subr.bf16.mxu0 0
    %1205 = vmatpush1.bf16.msra.mxu0 0
    %1206 = vmatprep.subr.bf16.mxu0 0
    %1207 = vmatpush1.bf16.msra.mxu0 0
    %1208 = vmatprep.subr.bf16.mxu0 0
    %1209 = vmatpush1.bf16.msra.mxu0 0
    %1210 = vmatprep.subr.bf16.mxu0 0
    %1211 = vmatpush1.bf16.msra.mxu0 0
    %1212 = vmatprep.subr.bf16.mxu0 0
    %1213 = vmatpush1.bf16.msra.mxu0 0
    %1214 = vmatprep.subr.bf16.mxu0 0
    %1215 = vmatpush1.bf16.msra.mxu0 0
    %1216 = vmatprep.mubr.bf16.mxu0 0
    %1217 = vmatmul.mubr.bf16.gmra.mrb[0].mxu0 %v1183
    %v1218 = vpop.f32.mrb[0].mxu0
    %v1219 = vadd.f32 %v445, %v1218
    %v1220 = vpop.f32.mrb[0].mxu0
    %v1221 = vadd.f32 %v449, %v1220
    %v1222 = vpop.f32.mrb[0].mxu0
    %v1223 = vadd.f32 %v445, %v1222
    %v1224 = vpop.f32.mrb[0].mxu0
    %v1225 = vadd.f32 %v449, %v1224
    %1226 = vdwg.mxu0
    %1227 = vmatprep.subr.bf16.mxu0 %v561
    %1228 = vmatpush1.bf16.msra.mxu0 %v560
    %1229 = vmatprep.subr.bf16.mxu0 %v565
    %1230 = vmatpush1.bf16.msra.mxu0 %v564
    %1231 = vmatprep.subr.bf16.mxu0 %v569
    %1232 = vmatpush1.bf16.msra.mxu0 %v568
    %1233 = vmatprep.subr.bf16.mxu0 %v573
    %1234 = vmatpush1.bf16.msra.mxu0 %v572
    %1235 = vmatprep.subr.bf16.mxu0 %v577
    %1236 = vmatpush1.bf16.msra.mxu0 %v576
    %1237 = vmatprep.subr.bf16.mxu0 %v581
    %1238 = vmatpush1.bf16.msra.mxu0 %v580
    %1239 = vmatprep.subr.bf16.mxu0 %v585
    %1240 = vmatpush1.bf16.msra.mxu0 %v584
    %1241 = vmatprep.subr.bf16.mxu0 %v589
    %1242 = vmatpush1.bf16.msra.mxu0 %v588
    %1243 = vmatprep.subr.bf16.mxu0 0
    %1244 = vmatpush1.bf16.msra.mxu0 0
    %1245 = vmatprep.subr.bf16.mxu0 0
    %1246 = vmatpush1.bf16.msra.mxu0 0
    %1247 = vmatprep.subr.bf16.mxu0 0
    %1248 = vmatpush1.bf16.msra.mxu0 0
    %1249 = vmatprep.subr.bf16.mxu0 0
    %1250 = vmatpush1.bf16.msra.mxu0 0
    %1251 = vmatprep.subr.bf16.mxu0 0
    %1252 = vmatpush1.bf16.msra.mxu0 0
    %1253 = vmatprep.subr.bf16.mxu0 0
    %1254 = vmatpush1.bf16.msra.mxu0 0
    %1255 = vmatprep.subr.bf16.mxu0 0
    %1256 = vmatpush1.bf16.msra.mxu0 0
    %1257 = vmatprep.subr.bf16.mxu0 0
    %1258 = vmatpush1.bf16.msra.mxu0 0
    %1259 = vmatprep.mubr.bf16.mxu0 0
    %1260 = vmatmul.mubr.bf16.gmra.mrb[0].mxu0 %v1183
    %v1261 = vpop.f32.mrb[0].mxu0
    %v1262 = vadd.f32 %v453, %v1261
    %v1263 = vpop.f32.mrb[0].mxu0
    %v1264 = vadd.f32 %v457, %v1263
    %v1265 = vpop.f32.mrb[0].mxu0
    %v1266 = vadd.f32 %v453, %v1265
    %v1267 = vpop.f32.mrb[0].mxu0
    %v1268 = vadd.f32 %v457, %v1267
    %1269 = vdwg.mxu0
    %v1270 = vxor.u32 %v1219, 2147483648
    %v1271 = vxor.u32 %v1223, 2147483648
    %v1272 = vmul.f32 %v1270, 1.442695
    %v1273 = vpow.pop %v1272
    %v1274 = vmul.f32 %v1271, 1.442695
    %v1275 = vpow.pop %v1274
    %v1276 = vadd.f32 %v1273, 1.0
    %v1277 = vadd.f32 %v1275, 1.0
    %v1278 = vrcp.pop %v1276
    %v1279 = vmul.f32 1.0, %v1278
    %v1280 = vrcp.pop %v1277
    %v1281 = vmul.f32 1.0, %v1280
    %v1282 = vxor.u32 %v1221, 2147483648
    %v1283 = vxor.u32 %v1225, 2147483648
    %v1284 = vmul.f32 %v1282, 1.442695
    %v1285 = vpow.pop %v1284
    %v1286 = vmul.f32 %v1283, 1.442695
    %v1287 = vpow.pop %v1286
    %v1288 = vadd.f32 %v1285, 1.0
    %v1289 = vadd.f32 %v1287, 1.0
    %v1290 = vrcp.pop %v1288
    %v1291 = vmul.f32 1.0, %v1290
    %v1292 = vrcp.pop %v1289
    %v1293 = vmul.f32 1.0, %v1292
    %v1294 = vmul.f32 %v1279, %v1264
    %v1295 = vmul.f32 %v1281, %v1268
    %v1296 = vadd.f32 %v1262, %v1294
    %v1297 = vadd.f32 %v1266, %v1295
    %v1298 = vtanh.pop %v1296
    %v1299 = vtanh.pop %v1297
    %v1300 = vsub.f32 1.0, %v1291
    %v1301 = vsub.f32 1.0, %v1293
    %v1302 = vmul.f32 %v1300, %v1298
    %v1303 = vmul.f32 %v1301, %v1299
    %v1304 = vmul.f32 %v1291, %v965
    %v1305 = vmul.f32 %v1293, %v966
    %v1306 = vadd.f32 %v1302, %v1304
    %v1307 = vadd.f32 %v1303, %v1305
    %v1308 = vsel %vm97, %v1306, 0.0
    %1309 = vadd.xlane.f32.xlu0 %v1308
    %v1310 = vpop.xlane.xlu0 %1309
    %v1311 = vsel %vm146, %v1307, 0.0
    %1312 = vadd.xlane.f32.xlu0 %v1311
    %v1313 = vpop.xlane.xlu0 %1312
    %v1314 = vmul.f32 %v1310, %v150
    %v1315 = vmul.f32 %v1313, %v150
    %v1316 = vsub.f32 %v1306, %v1314
    %v1317 = vsub.f32 %v1307, %v1315
    %v1318 = vmul.f32 %v1316, %v1316
    %v1319 = vmul.f32 %v1317, %v1317
    %v1320 = vsel %vm97, %v1318, 0.0
    %1321 = vadd.xlane.f32.xlu0 %v1320
    %v1322 = vpop.xlane.xlu0 %1321
    %v1323 = vsel %vm146, %v1319, 0.0
    %1324 = vadd.xlane.f32.xlu0 %v1323
    %v1325 = vpop.xlane.xlu0 %1324
    %v1326 = vmul.f32 %v1322, %v150
    %v1327 = vmul.f32 %v1325, %v150
    %v1328 = vadd.f32 %v1326, 1e-05
    %v1329 = vadd.f32 %v1327, 1e-05
    %v1330 = vrsqrt.pop %v1328
    %v1331 = vrsqrt.pop %v1329
    %v1332 = vmul.f32 %v1316, %v1330
    %v1333 = vmul.f32 %v1317, %v1331
    %v1334 = vmul.f32 %v1332, %v61
    %v1335 = vmul.f32 %v1333, %v61
    %v1336 = vadd.f32 %v1334, %v62
    %v1337 = vadd.f32 %v1335, %v62
    %v1338 = vpack.c.bf16 %v1337, %v1336
    %v1340 = vsel %vm97, %v1338, 0
    %1342 = vmatprep.subr.bf16.mxu0 0
    %1343 = vmatpush1.bf16.msra.mxu0 %v802
    %1344 = vmatprep.subr.bf16.mxu0 0
    %1345 = vmatpush1.bf16.msra.mxu0 %v803
    %1346 = vmatprep.subr.bf16.mxu0 0
    %1347 = vmatpush1.bf16.msra.mxu0 %v804
    %1348 = vmatprep.subr.bf16.mxu0 0
    %1349 = vmatpush1.bf16.msra.mxu0 %v805
    %1350 = vmatprep.subr.bf16.mxu0 0
    %1351 = vmatpush1.bf16.msra.mxu0 0
    %1352 = vmatprep.subr.bf16.mxu0 0
    %1353 = vmatpush1.bf16.msra.mxu0 0
    %1354 = vmatprep.subr.bf16.mxu0 0
    %1355 = vmatpush1.bf16.msra.mxu0 0
    %1356 = vmatprep.subr.bf16.mxu0 0
    %1357 = vmatpush1.bf16.msra.mxu0 0
    %1358 = vmatprep.subr.bf16.mxu0 0
    %1359 = vmatpush1.bf16.msra.mxu0 0
    %1360 = vmatprep.subr.bf16.mxu0 0
    %1361 = vmatpush1.bf16.msra.mxu0 0
    %1362 = vmatprep.subr.bf16.mxu0 0
    %1363 = vmatpush1.bf16.msra.mxu0 0
    %1364 = vmatprep.subr.bf16.mxu0 0
    %1365 = vmatpush1.bf16.msra.mxu0 0
    %1366 = vmatprep.subr.bf16.mxu0 0
    %1367 = vmatpush1.bf16.msra.mxu0 0
    %1368 = vmatprep.subr.bf16.mxu0 0
    %1369 = vmatpush1.bf16.msra.mxu0 0
    %1370 = vmatprep.subr.bf16.mxu0 0
    %1371 = vmatpush1.bf16.msra.mxu0 0
    %1372 = vmatprep.subr.bf16.mxu0 0
    %1373 = vmatpush1.bf16.msra.mxu0 0
    %1374 = vmatprep.mubr.bf16.mxu0 0
    %1375 = vmatmul.mubr.bf16.gmra.mrb[0].mxu0 %v1340
    %v1376 = vpop.f32.mrb[0].mxu0
    %v1377 = vadd.f32 %v785, %v1376
    %v1378 = vpop.f32.mrb[0].mxu0
    %v1379 = vpop.f32.mrb[0].mxu0
    %v1380 = vadd.f32 %v785, %v1379
    %v1381 = vpop.f32.mrb[0].mxu0
    %1382 = vdwg.mxu0
    %v1383 = vmax.f32 %v1377, 0.0
    %v1384 = vmax.f32 %v1380, 0.0
    %v1385 = vpack.c.bf16 %v1384, %v1383
    %1386 = vmatprep.subr.bf16.mxu0 0
    %1387 = vmatpush1.bf16.msra.mxu0 %v905
    %1388 = vmatprep.subr.bf16.mxu0 0
    %1389 = vmatpush1.bf16.msra.mxu0 %v906
    %1390 = vmatprep.subr.bf16.mxu0 0
    %1391 = vmatpush1.bf16.msra.mxu0 %v907
    %1392 = vmatprep.subr.bf16.mxu0 0
    %1393 = vmatpush1.bf16.msra.mxu0 %v908
    %1394 = vmatprep.subr.bf16.mxu0 0
    %1395 = vmatpush1.bf16.msra.mxu0 %v909
    %1396 = vmatprep.subr.bf16.mxu0 0
    %1397 = vmatpush1.bf16.msra.mxu0 %v910
    %1398 = vmatprep.subr.bf16.mxu0 0
    %1399 = vmatpush1.bf16.msra.mxu0 %v911
    %1400 = vmatprep.subr.bf16.mxu0 0
    %1401 = vmatpush1.bf16.msra.mxu0 %v912
    %1402 = vmatprep.subr.bf16.mxu0 0
    %1403 = vmatpush1.bf16.msra.mxu0 0
    %1404 = vmatprep.subr.bf16.mxu0 0
    %1405 = vmatpush1.bf16.msra.mxu0 0
    %1406 = vmatprep.subr.bf16.mxu0 0
    %1407 = vmatpush1.bf16.msra.mxu0 0
    %1408 = vmatprep.subr.bf16.mxu0 0
    %1409 = vmatpush1.bf16.msra.mxu0 0
    %1410 = vmatprep.subr.bf16.mxu0 0
    %1411 = vmatpush1.bf16.msra.mxu0 0
    %1412 = vmatprep.subr.bf16.mxu0 0
    %1413 = vmatpush1.bf16.msra.mxu0 0
    %1414 = vmatprep.subr.bf16.mxu0 0
    %1415 = vmatpush1.bf16.msra.mxu0 0
    %1416 = vmatprep.subr.bf16.mxu0 0
    %1417 = vmatpush1.bf16.msra.mxu0 0
    %1418 = vmatprep.mubr.bf16.mxu0 0
    %1419 = vmatmul.mubr.bf16.gmra.mrb[0].mxu0 %v1385
    %v1420 = vpop.f32.mrb[0].mxu0
    %v1421 = vadd.f32 0.0, %v1420
    %v1422 = vpop.f32.mrb[0].mxu0
    %v1423 = vpop.f32.mrb[0].mxu0
    %v1424 = vadd.f32 0.0, %v1423
    %v1425 = vpop.f32.mrb[0].mxu0
    %1426 = vdwg.mxu0
    %v1427 = vadd.f32 %v1306, %v1421
    %v1428 = vadd.f32 %v1307, %v1424
    %v1429 = vadd.f32 %v1427, %v964
    %v1430 = vadd.f32 %v1428, %v964
    %v1431 = vsel %vm97, %v1429, 0.0
    %1432 = vadd.xlane.f32.xlu0 %v1431
    %v1433 = vpop.xlane.xlu0 %1432
    %v1434 = vsel %vm146, %v1430, 0.0
    %1435 = vadd.xlane.f32.xlu0 %v1434
    %v1436 = vpop.xlane.xlu0 %1435
    %v1437 = vmul.f32 %v1433, %v150
    %v1438 = vmul.f32 %v1436, %v150
    %v1439 = vsub.f32 %v1429, %v1437
    %v1440 = vsub.f32 %v1430, %v1438
    %v1441 = vmul.f32 %v1439, %v1439
    %v1442 = vmul.f32 %v1440, %v1440
    %v1443 = vsel %vm97, %v1441, 0.0
    %1444 = vadd.xlane.f32.xlu0 %v1443
    %v1445 = vpop.xlane.xlu0 %1444
    %v1446 = vsel %vm146, %v1442, 0.0
    %1447 = vadd.xlane.f32.xlu0 %v1446
    %v1448 = vpop.xlane.xlu0 %1447
    %v1449 = vmul.f32 %v1445, %v150
    %v1450 = vmul.f32 %v1448, %v150
    %v1451 = vadd.f32 %v1449, 1e-05
    %v1452 = vadd.f32 %v1450, 1e-05
    %v1453 = vrsqrt.pop %v1451
    %v1454 = vrsqrt.pop %v1452
    %v1455 = vmul.f32 %v1439, %v1453
    %v1456 = vmul.f32 %v1440, %v1454
    %v1457 = vmul.f32 %v1455, %v59
    %v1458 = vmul.f32 %v1456, %v59
    %v1459 = vadd.f32 %v1457, %v60
    %v1460 = vadd.f32 %v1458, %v60
    %v1461 = vpack.c.bf16 %v1460, %v1459
    %v1463 = vsel %vm97, %v1461, 0
    %1465 = vmatprep.subr.bf16.mxu0 0
    %1466 = vmatpush1.bf16.msra.mxu0 %v201
    %1467 = vmatprep.subr.bf16.mxu0 0
    %1468 = vmatpush1.bf16.msra.mxu0 %v202
    %1469 = vmatprep.subr.bf16.mxu0 0
    %1470 = vmatpush1.bf16.msra.mxu0 %v203
    %1471 = vmatprep.subr.bf16.mxu0 0
    %1472 = vmatpush1.bf16.msra.mxu0 %v204
    %1473 = vmatprep.subr.bf16.mxu0 0
    %1474 = vmatpush1.bf16.msra.mxu0 0
    %1475 = vmatprep.subr.bf16.mxu0 0
    %1476 = vmatpush1.bf16.msra.mxu0 0
    %1477 = vmatprep.subr.bf16.mxu0 0
    %1478 = vmatpush1.bf16.msra.mxu0 0
    %1479 = vmatprep.subr.bf16.mxu0 0
    %1480 = vmatpush1.bf16.msra.mxu0 0
    %1481 = vmatprep.subr.bf16.mxu0 0
    %1482 = vmatpush1.bf16.msra.mxu0 0
    %1483 = vmatprep.subr.bf16.mxu0 0
    %1484 = vmatpush1.bf16.msra.mxu0 0
    %1485 = vmatprep.subr.bf16.mxu0 0
    %1486 = vmatpush1.bf16.msra.mxu0 0
    %1487 = vmatprep.subr.bf16.mxu0 0
    %1488 = vmatpush1.bf16.msra.mxu0 0
    %1489 = vmatprep.subr.bf16.mxu0 0
    %1490 = vmatpush1.bf16.msra.mxu0 0
    %1491 = vmatprep.subr.bf16.mxu0 0
    %1492 = vmatpush1.bf16.msra.mxu0 0
    %1493 = vmatprep.subr.bf16.mxu0 0
    %1494 = vmatpush1.bf16.msra.mxu0 0
    %1495 = vmatprep.subr.bf16.mxu0 0
    %1496 = vmatpush1.bf16.msra.mxu0 0
    %1497 = vmatprep.mubr.bf16.mxu0 0
    %1498 = vmatmul.mubr.bf16.gmra.mrb[0].mxu0 %v1463
    %v1499 = vpop.f32.mrb[0].mxu0
    %v1500 = vadd.f32 %v184, %v1499
    %v1501 = vpop.f32.mrb[0].mxu0
    %v1502 = vpop.f32.mrb[0].mxu0
    %v1503 = vadd.f32 %v184, %v1502
    %v1504 = vpop.f32.mrb[0].mxu0
    %1505 = vdwg.mxu0
    %v1506 = vpack.c.bf16 %v1503, %v1500
    %v1508 = vsel %vm97, %v1506, 0
    %1510 = vmatprep.subr.bf16.mxu0 0
    %1511 = vmatpush1.bf16.xpose.msra.mxu0 %v1508
    %1512 = vmatprep.subr.bf16.mxu0 0
    %1513 = vmatpush1.bf16.xpose.msra.mxu0 0
    %1514 = vmatprep.subr.bf16.mxu0 0
    %1515 = vmatpush1.bf16.xpose.msra.mxu0 0
    %1516 = vmatprep.subr.bf16.mxu0 0
    %1517 = vmatpush1.bf16.xpose.msra.mxu0 0
    %1518 = vmatprep.subr.bf16.mxu0 0
    %1519 = vmatpush1.bf16.xpose.msra.mxu0 0
    %1520 = vmatprep.subr.bf16.mxu0 0
    %1521 = vmatpush1.bf16.xpose.msra.mxu0 0
    %1522 = vmatprep.subr.bf16.mxu0 0
    %1523 = vmatpush1.bf16.xpose.msra.mxu0 0
    %1524 = vmatprep.subr.bf16.mxu0 0
    %1525 = vmatpush1.bf16.xpose.msra.mxu0 0
    %1526 = vmatprep.subr.bf16.mxu0 0
    %1527 = vmatpush1.bf16.xpose.msra.mxu0 0
    %1528 = vmatprep.subr.bf16.mxu0 0
    %1529 = vmatpush1.bf16.xpose.msra.mxu0 0
    %1530 = vmatprep.subr.bf16.mxu0 0
    %1531 = vmatpush1.bf16.xpose.msra.mxu0 0
    %1532 = vmatprep.subr.bf16.mxu0 0
    %1533 = vmatpush1.bf16.xpose.msra.mxu0 0
    %1534 = vmatprep.subr.bf16.mxu0 0
    %1535 = vmatpush1.bf16.xpose.msra.mxu0 0
    %1536 = vmatprep.subr.bf16.mxu0 0
    %1537 = vmatpush1.bf16.xpose.msra.mxu0 0
    %1538 = vmatprep.subr.bf16.mxu0 0
    %1539 = vmatpush1.bf16.xpose.msra.mxu0 0
    %1540 = vmatprep.subr.bf16.mxu0 0
    %1541 = vmatpush1.bf16.xpose.msra.mxu0 0
    %1542 = vmatprep.mubr.bf16.mxu0 0
    %1543 = vmatmul.mubr.bf16.gmra.mrb[0].mxu0 %v255
    %v1544 = vpop.f32.mrb[0].mxu0
    %v1545 = vadd.f32 0.0, %v1544
    %v1546 = vpop.f32.mrb[0].mxu0
    %v1547 = vpop.f32.mrb[0].mxu0
    %v1548 = vadd.f32 0.0, %v1547
    %v1549 = vpop.f32.mrb[0].mxu0
    %1550 = vdwg.mxu0
    %v1551 = vmul.f32 %v1545, 0.125
    %v1552 = vmul.f32 %v1548, 0.125
    %v1553 = vsel %vm303, %v1551, -inf
    %v1554 = vsel %vm305, %v1552, -inf
    %v1555 = vmax.f32 %v1553, %v1554
    %v1556 = vrot.slane %v1555, 4
    %v1557 = vmax.f32 %v1555, %v1556
    %v1558 = vrot.slane %v1557, 2
    %v1559 = vmax.f32 %v1557, %v1558
    %v1560 = vrot.slane %v1559, 1
    %v1561 = vmax.f32 %v1559, %v1560
    %v1562 = vsub.f32 %v1551, %v1561
    %v1563 = vsub.f32 %v1552, %v1561
    %v1564 = vmul.f32 %v1562, 1.442695
    %v1565 = vpow.pop %v1564
    %v1566 = vmul.f32 %v1563, 1.442695
    %v1567 = vpow.pop %v1566
    %v1568 = vsel %vm303, %v1565, 0.0
    %v1569 = vsel %vm305, %v1567, 0.0
    %v1570 = vadd.f32 %v1568, %v1569
    %v1571 = vrot.slane %v1570, 4
    %v1572 = vadd.f32 %v1570, %v1571
    %v1573 = vrot.slane %v1572, 2
    %v1574 = vadd.f32 %v1572, %v1573
    %v1575 = vrot.slane %v1574, 1
    %v1576 = vadd.f32 %v1574, %v1575
    %v1577 = vrcp.pop %v1576
    %v1578 = vmul.f32 %v1565, %v1577
    %v1579 = vmul.f32 %v1567, %v1577
    %v1580 = vadd.f32 %v1578, 1e-08
    %v1581 = vadd.f32 %v1579, 1e-08
    %v1582 = vsel %vm303, %v1580, 0.0
    %1583 = vadd.xlane.f32.xlu0 %v1582
    %v1584 = vpop.xlane.xlu0 %1583
    %v1585 = vsel %vm305, %v1581, 0.0
    %1586 = vadd.xlane.f32.xlu0 %v1585
    %v1587 = vpop.xlane.xlu0 %1586
    %v1588 = vrcp.pop %v1584
    %v1589 = vmul.f32 %v1580, %v1588
    %v1590 = vrcp.pop %v1587
    %v1591 = vmul.f32 %v1581, %v1590
    %v1592 = vpack.c.bf16 %v1591, %v1589
    %v1594 = vsel %vm303, %v1592, 0
    %1596 = vmatprep.subr.bf16.mxu0 0
    %1597 = vmatpush1.bf16.msra.mxu0 %v353
    %1598 = vmatprep.subr.bf16.mxu0 0
    %1599 = vmatpush1.bf16.msra.mxu0 0
    %1600 = vmatprep.subr.bf16.mxu0 0
    %1601 = vmatpush1.bf16.msra.mxu0 0
    %1602 = vmatprep.subr.bf16.mxu0 0
    %1603 = vmatpush1.bf16.msra.mxu0 0
    %1604 = vmatprep.subr.bf16.mxu0 0
    %1605 = vmatpush1.bf16.msra.mxu0 0
    %1606 = vmatprep.subr.bf16.mxu0 0
    %1607 = vmatpush1.bf16.msra.mxu0 0
    %1608 = vmatprep.subr.bf16.mxu0 0
    %1609 = vmatpush1.bf16.msra.mxu0 0
    %1610 = vmatprep.subr.bf16.mxu0 0
    %1611 = vmatpush1.bf16.msra.mxu0 0
    %1612 = vmatprep.subr.bf16.mxu0 0
    %1613 = vmatpush1.bf16.msra.mxu0 0
    %1614 = vmatprep.subr.bf16.mxu0 0
    %1615 = vmatpush1.bf16.msra.mxu0 0
    %1616 = vmatprep.subr.bf16.mxu0 0
    %1617 = vmatpush1.bf16.msra.mxu0 0
    %1618 = vmatprep.subr.bf16.mxu0 0
    %1619 = vmatpush1.bf16.msra.mxu0 0
    %1620 = vmatprep.subr.bf16.mxu0 0
    %1621 = vmatpush1.bf16.msra.mxu0 0
    %1622 = vmatprep.subr.bf16.mxu0 0
    %1623 = vmatpush1.bf16.msra.mxu0 0
    %1624 = vmatprep.subr.bf16.mxu0 0
    %1625 = vmatpush1.bf16.msra.mxu0 0
    %1626 = vmatprep.subr.bf16.mxu0 0
    %1627 = vmatpush1.bf16.msra.mxu0 0
    %1628 = vmatprep.mubr.bf16.mxu0 0
    %1629 = vmatmul.mubr.bf16.gmra.mrb[0].mxu0 %v1594
    %v1630 = vpop.f32.mrb[0].mxu0
    %v1631 = vadd.f32 0.0, %v1630
    %v1632 = vpop.f32.mrb[0].mxu0
    %v1633 = vpop.f32.mrb[0].mxu0
    %v1634 = vadd.f32 0.0, %v1633
    %v1635 = vpop.f32.mrb[0].mxu0
    %1636 = vdwg.mxu0
    %1639 = vrot.lane.b32.xlu0 %v1429, 64
    %v1640 = vpop.permute.xlu0 %1639
    %1641 = vrot.lane.b32.xlu0 %v1430, 64
    %v1642 = vpop.permute.xlu0 %1641
    %v1645 = vsel %vm97, %v1631, %v1640
    %v1646 = vsel %vm97, %v1634, %v1642
    %v1647 = vpack.c.bf16 %v1646, %v1645
    %1648 = vmatprep.subr.bf16.mxu0 %v559
    %1649 = vmatpush1.bf16.msra.mxu0 %v558
    %1650 = vmatprep.subr.bf16.mxu0 %v563
    %1651 = vmatpush1.bf16.msra.mxu0 %v562
    %1652 = vmatprep.subr.bf16.mxu0 %v567
    %1653 = vmatpush1.bf16.msra.mxu0 %v566
    %1654 = vmatprep.subr.bf16.mxu0 %v571
    %1655 = vmatpush1.bf16.msra.mxu0 %v570
    %1656 = vmatprep.subr.bf16.mxu0 %v575
    %1657 = vmatpush1.bf16.msra.mxu0 %v574
    %1658 = vmatprep.subr.bf16.mxu0 %v579
    %1659 = vmatpush1.bf16.msra.mxu0 %v578
    %1660 = vmatprep.subr.bf16.mxu0 %v583
    %1661 = vmatpush1.bf16.msra.mxu0 %v582
    %1662 = vmatprep.subr.bf16.mxu0 %v587
    %1663 = vmatpush1.bf16.msra.mxu0 %v586
    %1664 = vmatprep.subr.bf16.mxu0 0
    %1665 = vmatpush1.bf16.msra.mxu0 0
    %1666 = vmatprep.subr.bf16.mxu0 0
    %1667 = vmatpush1.bf16.msra.mxu0 0
    %1668 = vmatprep.subr.bf16.mxu0 0
    %1669 = vmatpush1.bf16.msra.mxu0 0
    %1670 = vmatprep.subr.bf16.mxu0 0
    %1671 = vmatpush1.bf16.msra.mxu0 0
    %1672 = vmatprep.subr.bf16.mxu0 0
    %1673 = vmatpush1.bf16.msra.mxu0 0
    %1674 = vmatprep.subr.bf16.mxu0 0
    %1675 = vmatpush1.bf16.msra.mxu0 0
    %1676 = vmatprep.subr.bf16.mxu0 0
    %1677 = vmatpush1.bf16.msra.mxu0 0
    %1678 = vmatprep.subr.bf16.mxu0 0
    %1679 = vmatpush1.bf16.msra.mxu0 0
    %1680 = vmatprep.mubr.bf16.mxu0 0
    %1681 = vmatmul.mubr.bf16.gmra.mrb[0].mxu0 %v1647
    %v1682 = vpop.f32.mrb[0].mxu0
    %v1683 = vadd.f32 %v445, %v1682
    %v1684 = vpop.f32.mrb[0].mxu0
    %v1685 = vadd.f32 %v449, %v1684
    %v1686 = vpop.f32.mrb[0].mxu0
    %v1687 = vadd.f32 %v445, %v1686
    %v1688 = vpop.f32.mrb[0].mxu0
    %v1689 = vadd.f32 %v449, %v1688
    %1690 = vdwg.mxu0
    %1691 = vmatprep.subr.bf16.mxu0 %v561
    %1692 = vmatpush1.bf16.msra.mxu0 %v560
    %1693 = vmatprep.subr.bf16.mxu0 %v565
    %1694 = vmatpush1.bf16.msra.mxu0 %v564
    %1695 = vmatprep.subr.bf16.mxu0 %v569
    %1696 = vmatpush1.bf16.msra.mxu0 %v568
    %1697 = vmatprep.subr.bf16.mxu0 %v573
    %1698 = vmatpush1.bf16.msra.mxu0 %v572
    %1699 = vmatprep.subr.bf16.mxu0 %v577
    %1700 = vmatpush1.bf16.msra.mxu0 %v576
    %1701 = vmatprep.subr.bf16.mxu0 %v581
    %1702 = vmatpush1.bf16.msra.mxu0 %v580
    %1703 = vmatprep.subr.bf16.mxu0 %v585
    %1704 = vmatpush1.bf16.msra.mxu0 %v584
    %1705 = vmatprep.subr.bf16.mxu0 %v589
    %1706 = vmatpush1.bf16.msra.mxu0 %v588
    %1707 = vmatprep.subr.bf16.mxu0 0
    %1708 = vmatpush1.bf16.msra.mxu0 0
    %1709 = vmatprep.subr.bf16.mxu0 0
    %1710 = vmatpush1.bf16.msra.mxu0 0
    %1711 = vmatprep.subr.bf16.mxu0 0
    %1712 = vmatpush1.bf16.msra.mxu0 0
    %1713 = vmatprep.subr.bf16.mxu0 0
    %1714 = vmatpush1.bf16.msra.mxu0 0
    %1715 = vmatprep.subr.bf16.mxu0 0
    %1716 = vmatpush1.bf16.msra.mxu0 0
    %1717 = vmatprep.subr.bf16.mxu0 0
    %1718 = vmatpush1.bf16.msra.mxu0 0
    %1719 = vmatprep.subr.bf16.mxu0 0
    %1720 = vmatpush1.bf16.msra.mxu0 0
    %1721 = vmatprep.subr.bf16.mxu0 0
    %1722 = vmatpush1.bf16.msra.mxu0 0
    %1723 = vmatprep.mubr.bf16.mxu0 0
    %1724 = vmatmul.mubr.bf16.gmra.mrb[0].mxu0 %v1647
    %v1725 = vpop.f32.mrb[0].mxu0
    %v1726 = vadd.f32 %v453, %v1725
    %v1727 = vpop.f32.mrb[0].mxu0
    %v1728 = vadd.f32 %v457, %v1727
    %v1729 = vpop.f32.mrb[0].mxu0
    %v1730 = vadd.f32 %v453, %v1729
    %v1731 = vpop.f32.mrb[0].mxu0
    %v1732 = vadd.f32 %v457, %v1731
    %1733 = vdwg.mxu0
    %v1734 = vxor.u32 %v1683, 2147483648
    %v1735 = vxor.u32 %v1687, 2147483648
    %v1736 = vmul.f32 %v1734, 1.442695
    %v1737 = vpow.pop %v1736
    %v1738 = vmul.f32 %v1735, 1.442695
    %v1739 = vpow.pop %v1738
    %v1740 = vadd.f32 %v1737, 1.0
    %v1741 = vadd.f32 %v1739, 1.0
    %v1742 = vrcp.pop %v1740
    %v1743 = vmul.f32 1.0, %v1742
    %v1744 = vrcp.pop %v1741
    %v1745 = vmul.f32 1.0, %v1744
    %v1746 = vxor.u32 %v1685, 2147483648
    %v1747 = vxor.u32 %v1689, 2147483648
    %v1748 = vmul.f32 %v1746, 1.442695
    %v1749 = vpow.pop %v1748
    %v1750 = vmul.f32 %v1747, 1.442695
    %v1751 = vpow.pop %v1750
    %v1752 = vadd.f32 %v1749, 1.0
    %v1753 = vadd.f32 %v1751, 1.0
    %v1754 = vrcp.pop %v1752
    %v1755 = vmul.f32 1.0, %v1754
    %v1756 = vrcp.pop %v1753
    %v1757 = vmul.f32 1.0, %v1756
    %v1758 = vmul.f32 %v1743, %v1728
    %v1759 = vmul.f32 %v1745, %v1732
    %v1760 = vadd.f32 %v1726, %v1758
    %v1761 = vadd.f32 %v1730, %v1759
    %v1762 = vtanh.pop %v1760
    %v1763 = vtanh.pop %v1761
    %v1764 = vsub.f32 1.0, %v1755
    %v1765 = vsub.f32 1.0, %v1757
    %v1766 = vmul.f32 %v1764, %v1762
    %v1767 = vmul.f32 %v1765, %v1763
    %v1768 = vmul.f32 %v1755, %v1429
    %v1769 = vmul.f32 %v1757, %v1430
    %v1770 = vadd.f32 %v1766, %v1768
    %v1771 = vadd.f32 %v1767, %v1769
    %v1772 = vsel %vm97, %v1770, 0.0
    %1773 = vadd.xlane.f32.xlu0 %v1772
    %v1774 = vpop.xlane.xlu0 %1773
    %v1775 = vsel %vm146, %v1771, 0.0
    %1776 = vadd.xlane.f32.xlu0 %v1775
    %v1777 = vpop.xlane.xlu0 %1776
    %v1778 = vmul.f32 %v1774, %v150
    %v1779 = vmul.f32 %v1777, %v150
    %v1780 = vsub.f32 %v1770, %v1778
    %v1781 = vsub.f32 %v1771, %v1779
    %v1782 = vmul.f32 %v1780, %v1780
    %v1783 = vmul.f32 %v1781, %v1781
    %v1784 = vsel %vm97, %v1782, 0.0
    %1785 = vadd.xlane.f32.xlu0 %v1784
    %v1786 = vpop.xlane.xlu0 %1785
    %v1787 = vsel %vm146, %v1783, 0.0
    %1788 = vadd.xlane.f32.xlu0 %v1787
    %v1789 = vpop.xlane.xlu0 %1788
    %v1790 = vmul.f32 %v1786, %v150
    %v1791 = vmul.f32 %v1789, %v150
    %v1792 = vadd.f32 %v1790, 1e-05
    %v1793 = vadd.f32 %v1791, 1e-05
    %v1794 = vrsqrt.pop %v1792
    %v1795 = vrsqrt.pop %v1793
    %v1796 = vmul.f32 %v1780, %v1794
    %v1797 = vmul.f32 %v1781, %v1795
    %v1798 = vmul.f32 %v1796, %v61
    %v1799 = vmul.f32 %v1797, %v61
    %v1800 = vadd.f32 %v1798, %v62
    %v1801 = vadd.f32 %v1799, %v62
    %v1802 = vpack.c.bf16 %v1801, %v1800
    %v1804 = vsel %vm97, %v1802, 0
    %1806 = vmatprep.subr.bf16.mxu0 0
    %1807 = vmatpush1.bf16.msra.mxu0 %v802
    %1808 = vmatprep.subr.bf16.mxu0 0
    %1809 = vmatpush1.bf16.msra.mxu0 %v803
    %1810 = vmatprep.subr.bf16.mxu0 0
    %1811 = vmatpush1.bf16.msra.mxu0 %v804
    %1812 = vmatprep.subr.bf16.mxu0 0
    %1813 = vmatpush1.bf16.msra.mxu0 %v805
    %1814 = vmatprep.subr.bf16.mxu0 0
    %1815 = vmatpush1.bf16.msra.mxu0 0
    %1816 = vmatprep.subr.bf16.mxu0 0
    %1817 = vmatpush1.bf16.msra.mxu0 0
    %1818 = vmatprep.subr.bf16.mxu0 0
    %1819 = vmatpush1.bf16.msra.mxu0 0
    %1820 = vmatprep.subr.bf16.mxu0 0
    %1821 = vmatpush1.bf16.msra.mxu0 0
    %1822 = vmatprep.subr.bf16.mxu0 0
    %1823 = vmatpush1.bf16.msra.mxu0 0
    %1824 = vmatprep.subr.bf16.mxu0 0
    %1825 = vmatpush1.bf16.msra.mxu0 0
    %1826 = vmatprep.subr.bf16.mxu0 0
    %1827 = vmatpush1.bf16.msra.mxu0 0
    %1828 = vmatprep.subr.bf16.mxu0 0
    %1829 = vmatpush1.bf16.msra.mxu0 0
    %1830 = vmatprep.subr.bf16.mxu0 0
    %1831 = vmatpush1.bf16.msra.mxu0 0
    %1832 = vmatprep.subr.bf16.mxu0 0
    %1833 = vmatpush1.bf16.msra.mxu0 0
    %1834 = vmatprep.subr.bf16.mxu0 0
    %1835 = vmatpush1.bf16.msra.mxu0 0
    %1836 = vmatprep.subr.bf16.mxu0 0
    %1837 = vmatpush1.bf16.msra.mxu0 0
    %1838 = vmatprep.mubr.bf16.mxu0 0
    %1839 = vmatmul.mubr.bf16.gmra.mrb[0].mxu0 %v1804
    %v1840 = vpop.f32.mrb[0].mxu0
    %v1841 = vadd.f32 %v785, %v1840
    %v1842 = vpop.f32.mrb[0].mxu0
    %v1843 = vpop.f32.mrb[0].mxu0
    %v1844 = vadd.f32 %v785, %v1843
    %v1845 = vpop.f32.mrb[0].mxu0
    %1846 = vdwg.mxu0
    %v1847 = vmax.f32 %v1841, 0.0
    %v1848 = vmax.f32 %v1844, 0.0
    %v1849 = vpack.c.bf16 %v1848, %v1847
    %1850 = vmatprep.subr.bf16.mxu0 0
    %1851 = vmatpush1.bf16.msra.mxu0 %v905
    %1852 = vmatprep.subr.bf16.mxu0 0
    %1853 = vmatpush1.bf16.msra.mxu0 %v906
    %1854 = vmatprep.subr.bf16.mxu0 0
    %1855 = vmatpush1.bf16.msra.mxu0 %v907
    %1856 = vmatprep.subr.bf16.mxu0 0
    %1857 = vmatpush1.bf16.msra.mxu0 %v908
    %1858 = vmatprep.subr.bf16.mxu0 0
    %1859 = vmatpush1.bf16.msra.mxu0 %v909
    %1860 = vmatprep.subr.bf16.mxu0 0
    %1861 = vmatpush1.bf16.msra.mxu0 %v910
    %1862 = vmatprep.subr.bf16.mxu0 0
    %1863 = vmatpush1.bf16.msra.mxu0 %v911
    %1864 = vmatprep.subr.bf16.mxu0 0
    %1865 = vmatpush1.bf16.msra.mxu0 %v912
    %1866 = vmatprep.subr.bf16.mxu0 0
    %1867 = vmatpush1.bf16.msra.mxu0 0
    %1868 = vmatprep.subr.bf16.mxu0 0
    %1869 = vmatpush1.bf16.msra.mxu0 0
    %1870 = vmatprep.subr.bf16.mxu0 0
    %1871 = vmatpush1.bf16.msra.mxu0 0
    %1872 = vmatprep.subr.bf16.mxu0 0
    %1873 = vmatpush1.bf16.msra.mxu0 0
    %1874 = vmatprep.subr.bf16.mxu0 0
    %1875 = vmatpush1.bf16.msra.mxu0 0
    %1876 = vmatprep.subr.bf16.mxu0 0
    %1877 = vmatpush1.bf16.msra.mxu0 0
    %1878 = vmatprep.subr.bf16.mxu0 0
    %1879 = vmatpush1.bf16.msra.mxu0 0
    %1880 = vmatprep.subr.bf16.mxu0 0
    %1881 = vmatpush1.bf16.msra.mxu0 0
    %1882 = vmatprep.mubr.bf16.mxu0 0
    %1883 = vmatmul.mubr.bf16.gmra.mrb[0].mxu0 %v1849
    %v1884 = vpop.f32.mrb[0].mxu0
    %v1885 = vadd.f32 0.0, %v1884
    %v1886 = vpop.f32.mrb[0].mxu0
    %v1887 = vpop.f32.mrb[0].mxu0
    %v1888 = vadd.f32 0.0, %v1887
    %v1889 = vpop.f32.mrb[0].mxu0
    %1890 = vdwg.mxu0
    %v1891 = vadd.f32 %v1770, %v1885
    %v1892 = vadd.f32 %v1771, %v1888
    %v1893 = vadd.f32 %v1891, %v964
    %v1894 = vadd.f32 %v1892, %v964
    %v1895 = vld [vmem:[#allocation5 + $0x380] sm:$0xff]
    %v1896 = vld [vmem:[#allocation5 + $0x390] sm:$0xff]
    %v1897 = vld [vmem:[#allocation5 + $0x3a0] sm:$0xff]
    %v1898 = vld [vmem:[#allocation5 + $0x3b0] sm:$0xff]
    %v1899 = vld [vmem:[#allocation5 + $0x3c0] sm:$0xff]
    %v1900 = vld [vmem:[#allocation5 + $0x3d0] sm:$0xff]
    %v1901 = vld [vmem:[#allocation5 + $0x3e0] sm:$0xff]
    %v1902 = vld [vmem:[#allocation5 + $0x3f0] sm:$0xff]
    %v1903 = vpack.c.bf16 %v1894, %v1893
    %s1904 = scalar_lea.vmem [#allocation7], 5
    %v1905 = vld [vmem:[%s1904] ss:$8 sm:$0x3]
    %v1907 = vlaneseq
    %v1908 = vshrl.u32 %v1907, 7
    %v1909 = vsub.s32 0, %v1908
    %v1910 = vrot.slane %v1905, %v1909
    %v1911 = vlaneseq
    %v1912 = vshrl.u32 %v1911, 7
    %v1913 = vsub.s32 1, %v1912
    %v1914 = vrot.slane %v1905, %v1913
    %v1925 = vunpack.c.l.b16 %v1895
    %v1926 = vunpack.c.h.b16 %v1895
    %v1927 = vunpack.c.l.b16 %v1896
    %v1928 = vunpack.c.h.b16 %v1896
    %v1929 = vunpack.c.l.b16 %v1897
    %v1930 = vunpack.c.h.b16 %v1897
    %v1931 = vunpack.c.l.b16 %v1898
    %v1932 = vunpack.c.h.b16 %v1898
    %v1933 = vunpack.c.l.b16 %v1899
    %v1934 = vunpack.c.h.b16 %v1899
    %v1935 = vunpack.c.l.b16 %v1900
    %v1936 = vunpack.c.h.b16 %v1900
    %v1937 = vunpack.c.l.b16 %v1901
    %v1938 = vunpack.c.h.b16 %v1901
    %v1939 = vunpack.c.l.b16 %v1902
    %v1940 = vunpack.c.h.b16 %v1902
    %v1941 = vpack.c.b16 %v1927, %v1925
    %v1942 = vpack.c.b16 %v1928, %v1926
    %v1943 = vpack.c.b16 %v1931, %v1929
    %v1944 = vpack.c.b16 %v1932, %v1930
    %v1945 = vpack.c.b16 %v1935, %v1933
    %v1946 = vpack.c.b16 %v1936, %v1934
    %v1947 = vpack.c.b16 %v1939, %v1937
    %v1948 = vpack.c.b16 %v1940, %v1938
    %v1958 = vsel %vm97, %v1903, 0
    %1960 = vmatprep.subr.bf16.mxu0 %v1942
    %1961 = vmatpush1.bf16.msra.mxu0 %v1941
    %1962 = vmatprep.subr.bf16.mxu0 %v1944
    %1963 = vmatpush1.bf16.msra.mxu0 %v1943
    %1964 = vmatprep.subr.bf16.mxu0 %v1946
    %1965 = vmatpush1.bf16.msra.mxu0 %v1945
    %1966 = vmatprep.subr.bf16.mxu0 %v1948
    %1967 = vmatpush1.bf16.msra.mxu0 %v1947
    %1968 = vmatprep.subr.bf16.mxu0 0
    %1969 = vmatpush1.bf16.msra.mxu0 0
    %1970 = vmatprep.subr.bf16.mxu0 0
    %1971 = vmatpush1.bf16.msra.mxu0 0
    %1972 = vmatprep.subr.bf16.mxu0 0
    %1973 = vmatpush1.bf16.msra.mxu0 0
    %1974 = vmatprep.subr.bf16.mxu0 0
    %1975 = vmatpush1.bf16.msra.mxu0 0
    %1976 = vmatprep.subr.bf16.mxu0 0
    %1977 = vmatpush1.bf16.msra.mxu0 0
    %1978 = vmatprep.subr.bf16.mxu0 0
    %1979 = vmatpush1.bf16.msra.mxu0 0
    %1980 = vmatprep.subr.bf16.mxu0 0
    %1981 = vmatpush1.bf16.msra.mxu0 0
    %1982 = vmatprep.subr.bf16.mxu0 0
    %1983 = vmatpush1.bf16.msra.mxu0 0
    %1984 = vmatprep.subr.bf16.mxu0 0
    %1985 = vmatpush1.bf16.msra.mxu0 0
    %1986 = vmatprep.subr.bf16.mxu0 0
    %1987 = vmatpush1.bf16.msra.mxu0 0
    %1988 = vmatprep.subr.bf16.mxu0 0
    %1989 = vmatpush1.bf16.msra.mxu0 0
    %1990 = vmatprep.subr.bf16.mxu0 0
    %1991 = vmatpush1.bf16.msra.mxu0 0
    %1992 = vmatprep.mubr.bf16.mxu0 0
    %1993 = vmatmul.mubr.bf16.gmra.mrb[0].mxu0 %v1958
    %v1994 = vpop.f32.mrb[0].mxu0
    %v1995 = vadd.f32 %v1910, %v1994
    %v1996 = vpop.f32.mrb[0].mxu0
    %v1997 = vadd.f32 %v1914, %v1996
    %v1998 = vpop.f32.mrb[0].mxu0
    %v1999 = vadd.f32 %v1910, %v1998
    %v2000 = vpop.f32.mrb[0].mxu0
    %v2001 = vadd.f32 %v1914, %v2000
    %2002 = vdwg.mxu0
    %v2003 = vmax.f32 %v1995, 0.0
    %v2004 = vmax.f32 %v1997, 0.0
    %v2005 = vmax.f32 %v1999, 0.0
    %v2006 = vmax.f32 %v2001, 0.0
    %v2007 = vld [vmem:[#allocation5 + $0x400] sm:$0xff]
    %v2008 = vld [vmem:[#allocation5 + $0x410] sm:$0xff]
    %v2009 = vld [vmem:[#allocation5 + $0x420] sm:$0xff]
    %v2010 = vld [vmem:[#allocation5 + $0x430] sm:$0xff]
    %v2011 = vld [vmem:[#allocation5 + $0x440] sm:$0xff]
    %v2012 = vld [vmem:[#allocation5 + $0x450] sm:$0xff]
    %v2013 = vld [vmem:[#allocation5 + $0x460] sm:$0xff]
    %v2014 = vld [vmem:[#allocation5 + $0x470] sm:$0xff]
    %v2015 = vld [vmem:[#allocation5 + $0x480] sm:$0xff]
    %v2016 = vld [vmem:[#allocation5 + $0x490] sm:$0xff]
    %v2017 = vld [vmem:[#allocation5 + $0x4a0] sm:$0xff]
    %v2018 = vld [vmem:[#allocation5 + $0x4b0] sm:$0xff]
    %v2019 = vld [vmem:[#allocation5 + $0x4c0] sm:$0xff]
    %v2020 = vld [vmem:[#allocation5 + $0x4d0] sm:$0xff]
    %v2021 = vld [vmem:[#allocation5 + $0x4e0] sm:$0xff]
    %v2022 = vld [vmem:[#allocation5 + $0x4f0] sm:$0xff]
    %v2023 = vld [vmem:[#allocation5 + $0x500] sm:$0xff]
    %v2024 = vld [vmem:[#allocation5 + $0x510] sm:$0xff]
    %v2025 = vld [vmem:[#allocation5 + $0x520] sm:$0xff]
    %v2026 = vld [vmem:[#allocation5 + $0x530] sm:$0xff]
    %v2027 = vld [vmem:[#allocation5 + $0x540] sm:$0xff]
    %v2028 = vld [vmem:[#allocation5 + $0x550] sm:$0xff]
    %v2029 = vld [vmem:[#allocation5 + $0x560] sm:$0xff]
    %v2030 = vld [vmem:[#allocation5 + $0x570] sm:$0xff]
    %v2031 = vld [vmem:[#allocation5 + $0x580] sm:$0xff]
    %v2032 = vld [vmem:[#allocation5 + $0x590] sm:$0xff]
    %v2033 = vld [vmem:[#allocation5 + $0x5a0] sm:$0xff]
    %v2034 = vld [vmem:[#allocation5 + $0x5b0] sm:$0xff]
    %v2035 = vld [vmem:[#allocation5 + $0x5c0] sm:$0xff]
    %v2036 = vld [vmem:[#allocation5 + $0x5d0] sm:$0xff]
    %v2037 = vld [vmem:[#allocation5 + $0x5e0] sm:$0xff]
    %v2038 = vld [vmem:[#allocation5 + $0x5f0] sm:$0xff]
    %v2039 = vpack.c.bf16 %v2005, %v2003
    %v2040 = vpack.c.bf16 %v2006, %v2004
    %s2041 = scalar_lea.vmem [#allocation7], 6
    %v2042 = vld [vmem:[%s2041] ss:$8 sm:$0x3]
    %v2044 = vlaneseq
    %v2045 = vshrl.u32 %v2044, 7
    %v2046 = vsub.s32 0, %v2045
    %v2047 = vrot.slane %v2042, %v2046
    %v2048 = vlaneseq
    %v2049 = vshrl.u32 %v2048, 7
    %v2050 = vsub.s32 1, %v2049
    %v2051 = vrot.slane %v2042, %v2050
    %v2086 = vunpack.c.l.b16 %v2007
    %v2087 = vunpack.c.h.b16 %v2007
    %v2088 = vunpack.c.l.b16 %v2008
    %v2089 = vunpack.c.h.b16 %v2008
    %v2090 = vunpack.c.l.b16 %v2009
    %v2091 = vunpack.c.h.b16 %v2009
    %v2092 = vunpack.c.l.b16 %v2010
    %v2093 = vunpack.c.h.b16 %v2010
    %v2094 = vunpack.c.l.b16 %v2011
    %v2095 = vunpack.c.h.b16 %v2011
    %v2096 = vunpack.c.l.b16 %v2012
    %v2097 = vunpack.c.h.b16 %v2012
    %v2098 = vunpack.c.l.b16 %v2013
    %v2099 = vunpack.c.h.b16 %v2013
    %v2100 = vunpack.c.l.b16 %v2014
    %v2101 = vunpack.c.h.b16 %v2014
    %v2102 = vunpack.c.l.b16 %v2015
    %v2103 = vunpack.c.h.b16 %v2015
    %v2104 = vunpack.c.l.b16 %v2016
    %v2105 = vunpack.c.h.b16 %v2016
    %v2106 = vunpack.c.l.b16 %v2017
    %v2107 = vunpack.c.h.b16 %v2017
    %v2108 = vunpack.c.l.b16 %v2018
    %v2109 = vunpack.c.h.b16 %v2018
    %v2110 = vunpack.c.l.b16 %v2019
    %v2111 = vunpack.c.h.b16 %v2019
    %v2112 = vunpack.c.l.b16 %v2020
    %v2113 = vunpack.c.h.b16 %v2020
    %v2114 = vunpack.c.l.b16 %v2021
    %v2115 = vunpack.c.h.b16 %v2021
    %v2116 = vunpack.c.l.b16 %v2022
    %v2117 = vunpack.c.h.b16 %v2022
    %v2118 = vunpack.c.l.b16 %v2023
    %v2119 = vunpack.c.h.b16 %v2023
    %v2120 = vunpack.c.l.b16 %v2024
    %v2121 = vunpack.c.h.b16 %v2024
    %v2122 = vunpack.c.l.b16 %v2025
    %v2123 = vunpack.c.h.b16 %v2025
    %v2124 = vunpack.c.l.b16 %v2026
    %v2125 = vunpack.c.h.b16 %v2026
    %v2126 = vunpack.c.l.b16 %v2027
    %v2127 = vunpack.c.h.b16 %v2027
    %v2128 = vunpack.c.l.b16 %v2028
    %v2129 = vunpack.c.h.b16 %v2028
    %v2130 = vunpack.c.l.b16 %v2029
    %v2131 = vunpack.c.h.b16 %v2029
    %v2132 = vunpack.c.l.b16 %v2030
    %v2133 = vunpack.c.h.b16 %v2030
    %v2134 = vunpack.c.l.b16 %v2031
    %v2135 = vunpack.c.h.b16 %v2031
    %v2136 = vunpack.c.l.b16 %v2032
    %v2137 = vunpack.c.h.b16 %v2032
    %v2138 = vunpack.c.l.b16 %v2033
    %v2139 = vunpack.c.h.b16 %v2033
    %v2140 = vunpack.c.l.b16 %v2034
    %v2141 = vunpack.c.h.b16 %v2034
    %v2142 = vunpack.c.l.b16 %v2035
    %v2143 = vunpack.c.h.b16 %v2035
    %v2144 = vunpack.c.l.b16 %v2036
    %v2145 = vunpack.c.h.b16 %v2036
    %v2146 = vunpack.c.l.b16 %v2037
    %v2147 = vunpack.c.h.b16 %v2037
    %v2148 = vunpack.c.l.b16 %v2038
    %v2149 = vunpack.c.h.b16 %v2038
    %v2150 = vpack.c.b16 %v2088, %v2086
    %v2151 = vpack.c.b16 %v2089, %v2087
    %v2152 = vpack.c.b16 %v2092, %v2090
    %v2153 = vpack.c.b16 %v2093, %v2091
    %v2154 = vpack.c.b16 %v2096, %v2094
    %v2155 = vpack.c.b16 %v2097, %v2095
    %v2156 = vpack.c.b16 %v2100, %v2098
    %v2157 = vpack.c.b16 %v2101, %v2099
    %v2158 = vpack.c.b16 %v2104, %v2102
    %v2159 = vpack.c.b16 %v2105, %v2103
    %v2160 = vpack.c.b16 %v2108, %v2106
    %v2161 = vpack.c.b16 %v2109, %v2107
    %v2162 = vpack.c.b16 %v2112, %v2110
    %v2163 = vpack.c.b16 %v2113, %v2111
    %v2164 = vpack.c.b16 %v2116, %v2114
    %v2165 = vpack.c.b16 %v2117, %v2115
    %v2166 = vpack.c.b16 %v2120, %v2118
    %v2167 = vpack.c.b16 %v2121, %v2119
    %v2168 = vpack.c.b16 %v2124, %v2122
    %v2169 = vpack.c.b16 %v2125, %v2123
    %v2170 = vpack.c.b16 %v2128, %v2126
    %v2171 = vpack.c.b16 %v2129, %v2127
    %v2172 = vpack.c.b16 %v2132, %v2130
    %v2173 = vpack.c.b16 %v2133, %v2131
    %v2174 = vpack.c.b16 %v2136, %v2134
    %v2175 = vpack.c.b16 %v2137, %v2135
    %v2176 = vpack.c.b16 %v2140, %v2138
    %v2177 = vpack.c.b16 %v2141, %v2139
    %v2178 = vpack.c.b16 %v2144, %v2142
    %v2179 = vpack.c.b16 %v2145, %v2143
    %v2180 = vpack.c.b16 %v2148, %v2146
    %v2181 = vpack.c.b16 %v2149, %v2147
    %2214 = vmatprep.subr.bf16.mxu0 %v2151
    %2215 = vmatpush1.bf16.msra.mxu0 %v2150
    %2216 = vmatprep.subr.bf16.mxu0 %v2153
    %2217 = vmatpush1.bf16.msra.mxu0 %v2152
    %2218 = vmatprep.subr.bf16.mxu0 %v2155
    %2219 = vmatpush1.bf16.msra.mxu0 %v2154
    %2220 = vmatprep.subr.bf16.mxu0 %v2157
    %2221 = vmatpush1.bf16.msra.mxu0 %v2156
    %2222 = vmatprep.subr.bf16.mxu0 %v2159
    %2223 = vmatpush1.bf16.msra.mxu0 %v2158
    %2224 = vmatprep.subr.bf16.mxu0 %v2161
    %2225 = vmatpush1.bf16.msra.mxu0 %v2160
    %2226 = vmatprep.subr.bf16.mxu0 %v2163
    %2227 = vmatpush1.bf16.msra.mxu0 %v2162
    %2228 = vmatprep.subr.bf16.mxu0 %v2165
    %2229 = vmatpush1.bf16.msra.mxu0 %v2164
    %2230 = vmatprep.subr.bf16.mxu0 %v2167
    %2231 = vmatpush1.bf16.msra.mxu0 %v2166
    %2232 = vmatprep.subr.bf16.mxu0 %v2169
    %2233 = vmatpush1.bf16.msra.mxu0 %v2168
    %2234 = vmatprep.subr.bf16.mxu0 %v2171
    %2235 = vmatpush1.bf16.msra.mxu0 %v2170
    %2236 = vmatprep.subr.bf16.mxu0 %v2173
    %2237 = vmatpush1.bf16.msra.mxu0 %v2172
    %2238 = vmatprep.subr.bf16.mxu0 %v2175
    %2239 = vmatpush1.bf16.msra.mxu0 %v2174
    %2240 = vmatprep.subr.bf16.mxu0 %v2177
    %2241 = vmatpush1.bf16.msra.mxu0 %v2176
    %2242 = vmatprep.subr.bf16.mxu0 %v2179
    %2243 = vmatpush1.bf16.msra.mxu0 %v2178
    %2244 = vmatprep.subr.bf16.mxu0 %v2181
    %2245 = vmatpush1.bf16.msra.mxu0 %v2180
    %2246 = vmatprep.mubr.bf16.mxu0 %v2040
    %2247 = vmatmul.mubr.bf16.gmra.mrb[0].mxu0 %v2039
    %v2248 = vpop.f32.mrb[0].mxu0
    %v2249 = vadd.f32 %v2047, %v2248
    %v2250 = vpop.f32.mrb[0].mxu0
    %v2251 = vadd.f32 %v2051, %v2250
    %v2252 = vpop.f32.mrb[0].mxu0
    %v2253 = vadd.f32 %v2047, %v2252
    %v2254 = vpop.f32.mrb[0].mxu0
    %v2255 = vadd.f32 %v2051, %v2254
    %2256 = vdwg.mxu0
    %vm2257 = vcmask 1041408
    %v2258 = vsel %vm2257, %v2253, -inf
    %v2259 = vmax.f32 %v2249, %v2258
    %v2260 = vrot.slane %v2259, 4
    %v2261 = vmax.f32 %v2259, %v2260
    %v2262 = vrot.slane %v2261, 2
    %v2263 = vmax.f32 %v2261, %v2262
    %v2264 = vrot.slane %v2263, 1
    %v2265 = vmax.f32 %v2263, %v2264
    %v2266 = vsel %vm2257, %v2255, -inf
    %v2267 = vmax.f32 %v2251, %v2266
    %v2268 = vrot.slane %v2267, 4
    %v2269 = vmax.f32 %v2267, %v2268
    %v2270 = vrot.slane %v2269, 2
    %v2271 = vmax.f32 %v2269, %v2270
    %v2272 = vrot.slane %v2271, 1
    %v2273 = vmax.f32 %v2271, %v2272
    %vm2274 = vcmask 516096
    %2275 = vst.msk [vmem:[#allocation8] sm:$0x1] %vm2274, %v2265
    %2277 = vrot.lane.b32.xlu0 %v2265, 64
    %v2278 = vpop.permute.xlu0 %2277
    %2280 = vst.msk [vmem:[#allocation8 + $0x1] sm:$0x1] %vm2274, %v2278
    %2281 = vst.msk [vmem:[#allocation8 + $0x2] sm:$0x1] %vm2274, %v2273
    %2283 = vrot.lane.b32.xlu0 %v2273, 64
    %v2284 = vpop.permute.xlu0 %2283
    %2286 = vst.msk [vmem:[#allocation8 + $0x3] sm:$0x1] %vm2274, %v2284
    // Predicated region
    $region26: #{tpu_custom_call.1} parent=1 // pred_check
      _
    $region27: #{tpu_custom_call.1} parent=1 // pred_check_branch
      %2288 = sbr.rel (0) target = $region29
    $region28: #{tpu_custom_call.1} parent=1 // pred_region
      %s2290 = ssub.s32 64, 64
      %2291 = vsyncadd [#allocation4], %s2290
      %s2293 = sshll.u32 [#allocation8], 4
      %s2294 = int_to_ptr.vmem [resolvable:$true] %s2293
      %2296 = dma.vmem_to_hbm [thread:$0]  %s2294, 64, %s3, [#allocation4]
    $region29: #{tpu_custom_call.1} parent=1 // pred_fallthru
      _
    // Predicated region
    $region30: #{tpu_custom_call.1} parent=1 // pred_check
      _
    $region31: #{tpu_custom_call.1} parent=1 // pred_check_branch
      %2298 = sbr.rel (0) target = $region33
    $region32: #{tpu_custom_call.1} parent=1 // pred_region
      %2299 = dma.done [#allocation4], 64
    $region33: #{tpu_custom_call.1} parent=1 // pred_fallthru
      _
    %2300 = vsyncpa [#allocation3], 1
    %2301 = vsyncpa [#allocation6], 1
    %2302 = vsyncpa [#allocation4], 1

</llo_original>
